<compile_context>
chip_gen: v5e
topology: v5e:2x2
jax: 0.10.0
libtpu: 0.0.40
codegen_flags: <defaults>
</compile_context>

<pallas_src>
import functools

import jax
import jax.numpy as jnp
from jax import lax
from jax.experimental import pallas as pl
from jax.experimental.pallas import tpu as pltpu

LANE = 128  # pad output-channel dims to a multiple of the TPU lane width


def _round_up(x, m):
    return (x + m - 1) // m * m


# ------------- fused [BN-apply+ReLU prologue] -> conv -> BN-partial-stats ------------- #
def _conv_bn_stats_kernel(x_ref, w_ref, st_ref, y_ref, stats_ref, *, kh, kw,
                          apply_prologue):
    # x_ref:     (1, H, W, Cin)          f32  one batch element
    # w_ref:     (KH*KW*Cin, Cout)       bf16 im2col-layout weights (lane-dense Cout)
    # st_ref:    (2, Cin)                f32  [scale; shift] of the previous BN stage
    # y_ref:     (1, Ho, Wo, Cout)       f32  pre-BN conv output
    # stats_ref: (1, 2, Cout)            f32  per-batch [sum; sum_sq] over Ho*Wo
    _, H, W, Cin = x_ref.shape
    K, Cout = w_ref.shape
    Ho = H - kh + 1
    Wo = W - kw + 1

    x = x_ref[0]                                           # (H, W, Cin) f32
    if apply_prologue:
        # Previous stage's BatchNorm + ReLU fused into this conv's input load:
        # y = relu(s * x + t).  Saves two full HBM passes per stage.
        s = st_ref[0:1, :].reshape(1, 1, Cin)
        t = st_ref[1:2, :].reshape(1, 1, Cin)
        x = jnp.maximum(x * s + t, 0.0)

    # im2col: concatenate the KH*KW shifted windows along the channel (lane) axis and
    # do ONE matmul with contraction K = KH*KW*Cin instead of 9 tiny K=Cin matmuls.
    # TODO(synk): for large images, tile Ho rows with a KH-1 halo (and use pltpu.roll
    # for the kx shift) so the input block fits v5e/v7x scoped VMEM.
    windows = [x[ky:ky + Ho, kx:kx + Wo, :]
               for ky in range(kh) for kx in range(kw)]
    lhs = jnp.concatenate(windows, axis=-1).reshape(Ho * Wo, K)

    # bf16 MXU operands, f32 accumulation.
    acc = jnp.dot(lhs.astype(jnp.bfloat16), w_ref[...],
                  preferred_element_type=jnp.float32)      # (Ho*Wo, Cout) f32

    y_ref[...] = acc.reshape(1, Ho, Wo, Cout)

    # single-pass per-channel partial statistics for the following BatchNorm
    ssum = jnp.sum(acc, axis=0, keepdims=True)             # (1, Cout)
    ssq = jnp.sum(acc * acc, axis=0, keepdims=True)        # (1, Cout)
    stats_ref[...] = jnp.concatenate([ssum, ssq], axis=0).reshape(1, 2, Cout)


def conv_bn_stats(x, w_flat, st, *, kh, kw, apply_prologue):
    """x: (N,H,W,Cin) f32, w_flat: (KH*KW*Cin, Cout_p) bf16, st: (2, Cin) f32.

    Returns (y: (N,Ho,Wo,Cout_p) f32, stats: (N,2,Cout_p) f32)."""
    N, H, W, Cin = x.shape
    K, Cout = w_flat.shape
    Ho, Wo = H - kh + 1, W - kw + 1
    kernel = functools.partial(_conv_bn_stats_kernel, kh=kh, kw=kw,
                               apply_prologue=apply_prologue)
    return pl.pallas_call(
        kernel,
        out_shape=(jax.ShapeDtypeStruct((N, Ho, Wo, Cout), jnp.float32),
                   jax.ShapeDtypeStruct((N, 2, Cout), jnp.float32)),
        grid=(N,),
        in_specs=[
            pl.BlockSpec((1, H, W, Cin), lambda n: (n, 0, 0, 0)),
            pl.BlockSpec((K, Cout), lambda n: (0, 0)),
            pl.BlockSpec((2, Cin), lambda n: (0, 0)),
        ],
        out_specs=(
            pl.BlockSpec((1, Ho, Wo, Cout), lambda n: (n, 0, 0, 0)),
            pl.BlockSpec((1, 2, Cout), lambda n: (n, 0, 0)),
        ),
        compiler_params=pltpu.CompilerParams(
            dimension_semantics=("parallel",)),
    )(x, w_flat, st)


# ----------------------- BN finalize: partial stats -> (scale, shift) ------------------ #
def _bn_finalize_kernel(stats_ref, gamma_ref, beta_ref, st_ref, *, eps, inv_count):
    # stats_ref: (N, 2, Cp); gamma/beta: (1, Cp); st_ref (out): (2, Cp) = [scale; shift]
    totals = jnp.sum(stats_ref[...], axis=0)               # (2, Cp)
    mean = totals[0:1, :] * inv_count                       # (1, Cp)
    ex2 = totals[1:2, :] * inv_count
    var = ex2 - mean * mean                                 # biased batch variance
    inv = lax.rsqrt(var + eps)
    s = gamma_ref[...] * inv
    t = beta_ref[...] - mean * s
    st_ref[...] = jnp.concatenate([s, t], axis=0)


def bn_finalize(stats, gamma_p, beta_p, *, count, eps=1e-5):
    _, _, Cp = stats.shape
    kernel = functools.partial(_bn_finalize_kernel, eps=eps, inv_count=1.0 / count)
    return pl.pallas_call(
        kernel,
        out_shape=jax.ShapeDtypeStruct((2, Cp), jnp.float32),
        in_specs=[pl.BlockSpec(memory_space=pltpu.MemorySpace.VMEM)] * 3,
        out_specs=pl.BlockSpec(memory_space=pltpu.MemorySpace.VMEM),
    )(stats, gamma_p.reshape(1, Cp), beta_p.reshape(1, Cp))


# ------------------- final BN apply + ReLU (no following conv to fuse into) ------------ #
def _bn_apply_relu_kernel(y_ref, st_ref, o_ref):
    C = y_ref.shape[-1]
    s = st_ref[0:1, :].reshape(1, 1, 1, C)
    t = st_ref[1:2, :].reshape(1, 1, 1, C)
    o_ref[...] = jnp.maximum(y_ref[...] * s + t, 0.0)


def bn_apply_relu(y, st):
    N, Ho, Wo, Cp = y.shape
    return pl.pallas_call(
        _bn_apply_relu_kernel,
        out_shape=jax.ShapeDtypeStruct(y.shape, jnp.float32),
        grid=(N,),
        in_specs=[pl.BlockSpec((1, Ho, Wo, Cp), lambda n: (n, 0, 0, 0)),
                  pl.BlockSpec((2, Cp), lambda n: (0, 0))],
        out_specs=pl.BlockSpec((1, Ho, Wo, Cp), lambda n: (n, 0, 0, 0)),
        compiler_params=pltpu.CompilerParams(
            dimension_semantics=("parallel",)),
    )(y, st)


# --------------------------------- parameter plumbing --------------------------------- #
def _pad_weight(w, cin_p, cout_p):
    """(KH,KW,Cin,Cout) f32 -> zero-padded, flattened (KH*KW*Cin_p, Cout_p) bf16."""
    kh, kw, cin, cout = w.shape
    w = jnp.pad(w, ((0, 0), (0, 0), (0, cin_p - cin), (0, cout_p - cout)))
    return w.reshape(kh * kw * cin_p, cout_p).astype(jnp.bfloat16)


def _pad_vec(v, cp, fill):
    return jnp.pad(v, (0, cp - v.shape[0]), constant_values=fill).astype(jnp.float32)


# ------------------------------------ DoubleConvBlock ---------------------------------- #
def double_conv_block(x_nchw, params, *, eps=1e-5):
    """Forward pass of DoubleConvBlock.  x_nchw: (N,Cin,H,W) -> (N,Cout,H-4,W-4)."""
    N = x_nchw.shape[0]
    w1, w2 = params["w1"], params["w2"]
    kh, kw, cin, cout = w1.shape
    cout_p = _round_up(cout, LANE)          # lane-dense intermediate/output channels

    # NCHW -> NHWC at the boundary only.
    # TODO(synk): callers that can provide NHWC directly should do so; this transpose
    # (and the one at the end) is an extra XLA HBM pass outside the kernels.
    x = jnp.transpose(x_nchw, (0, 2, 3, 1))

    w1p = _pad_weight(w1, cin, cout_p)      # (kh*kw*cin,    cout_p) bf16
    w2p = _pad_weight(w2, cout_p, cout_p)   # (kh*kw*cout_p, cout_p) bf16  (zero rows/cols)
    g1 = _pad_vec(params["gamma1"], cout_p, 1.0)
    b1 = _pad_vec(params["beta1"], cout_p, 0.0)
    g2 = _pad_vec(params["gamma2"], cout_p, 1.0)
    b2 = _pad_vec(params["beta2"], cout_p, 0.0)

    # identity scale/shift (conv1 has no fused prologue)
    ident = jnp.concatenate([jnp.ones((1, cin), jnp.float32),
                             jnp.zeros((1, cin), jnp.float32)], axis=0)

    # stage 1: conv1 + BN1 partial stats (conv bias dropped -- cancels with BN mean)
    y1, stats1 = conv_bn_stats(x, w1p, ident, kh=kh, kw=kw, apply_prologue=False)
    ho1, wo1 = y1.shape[1], y1.shape[2]
    st1 = bn_finalize(stats1, g1, b1, count=N * ho1 * wo1, eps=eps)

    # stage 2: BN1-apply + ReLU fused into conv2's prologue, conv2 + BN2 partial stats
    y2, stats2 = conv_bn_stats(y1, w2p, st1, kh=kh, kw=kw, apply_prologue=True)
    ho2, wo2 = y2.shape[1], y2.shape[2]
    st2 = bn_finalize(stats2, g2, b2, count=N * ho2 * wo2, eps=eps)

    # final BN2-apply + ReLU
    out = bn_apply_relu(y2, st2)

    out = out[..., :cout]                    # drop channel padding
    return jnp.transpose(out, (0, 3, 1, 2))  # NHWC -> NCHW


def init_params(key, in_channels, out_channels, k=3):
    ks = jax.random.split(key, 8)
    fan1 = in_channels * k * k
    fan2 = out_channels * k * k
    # (KH, KW, Cin, Cout) layout; deterministic synthetic init.
    w1 = jax.random.normal(ks[0], (k, k, in_channels, out_channels), jnp.float32) / jnp.sqrt(fan1)
    b1 = jax.random.normal(ks[1], (out_channels,), jnp.float32) * 0.01   # used by reference only
    w2 = jax.random.normal(ks[2], (k, k, out_channels, out_channels), jnp.float32) / jnp.sqrt(fan2)
    b2 = jax.random.normal(ks[3], (out_channels,), jnp.float32) * 0.01   # used by reference only
    gamma1 = 1.0 + 0.1 * jax.random.normal(ks[4], (out_channels,), jnp.float32)
    beta1 = 0.1 * jax.random.normal(ks[5], (out_channels,), jnp.float32)
    gamma2 = 1.0 + 0.1 * jax.random.normal(ks[6], (out_channels,), jnp.float32)
    beta2 = 0.1 * jax.random.normal(ks[7], (out_channels,), jnp.float32)
    return dict(w1=w1, b1=b1, w2=w2, b2=b2,
                gamma1=gamma1, beta1=beta1, gamma2=gamma2, beta2=beta2)


# --------------------------------------- reference ------------------------------------- #
def _ref_forward(x_nchw, p, eps=1e-5, conv_dtype=jnp.float32):
    """PyTorch-equivalent forward (includes the conv bias, which BN cancels).

    conv_dtype=bfloat16 gives a precision-matched reference for the bf16-MXU kernel."""
    def conv(x, w, b):
        w_oihw = jnp.transpose(w, (3, 2, 0, 1)).astype(conv_dtype)
        y = lax.conv_general_dilated(x.astype(conv_dtype), w_oihw, (1, 1), "VALID",
                                     dimension_numbers=("NCHW", "OIHW", "NCHW"),
                                     preferred_element_type=jnp.float32)
        return y + b[None, :, None, None]

    def bn_relu(x, g, bta):
        m = jnp.mean(x, axis=(0, 2, 3), keepdims=True)
        v = jnp.mean((x - m) ** 2, axis=(0, 2, 3), keepdims=True)
        y = (x - m) * lax.rsqrt(v + eps) * g[None, :, None, None] + bta[None, :, None, None]
        return jnp.maximum(y, 0.0)

    x = conv(x_nchw, p["w1"], p["b1"])
    x = bn_relu(x, p["gamma1"], p["beta1"])
    x = conv(x, p["w2"], p["b2"])
    x = bn_relu(x, p["gamma2"], p["beta2"])
    return x


if __name__ == "__main__":
    key = jax.random.PRNGKey(0)
    k_x, k_p = jax.random.split(key)

    N, C_in, C_out, H, W = 2, 4, 8, 16, 16
    x = jax.random.normal(k_x, (N, C_in, H, W), jnp.float32)
    params = init_params(k_p, C_in, C_out)

    out = jax.block_until_ready(double_conv_block(x, params))
    assert out.shape == (N, C_out, H - 4, W - 4), out.shape

    # precision-matched reference (bf16 MXU operands, f32 accumulation + f32 BN)
    ref_bf16 = _ref_forward(x, params, conv_dtype=jnp.bfloat16)
    err_bf16 = float(jnp.max(jnp.abs(out - ref_bf16)))
    assert jnp.allclose(out, ref_bf16, atol=1e-2, rtol=1e-2), err_bf16

    # loose sanity check against the pure-f32 reference (difference = bf16 operand rounding)
    ref_f32 = _ref_forward(x, params, conv_dtype=jnp.float32)
    err_f32 = float(jnp.max(jnp.abs(out - ref_f32)))
    assert jnp.allclose(out, ref_f32, atol=1e-1, rtol=1e-1), err_f32

    print("KERNEL_OK")
</pallas_src>

<mosaic_0001>
module attributes {stable_mosaic.version = 11 : i64} {
  func.func @_conv_bn_stats_kernel(%arg0: i32, %arg1: memref<1x16x16x4xf32, #tpu.memory_space<vmem>>, %arg2: memref<36x128xbf16, #tpu.memory_space<vmem>>, %arg3: memref<2x4xf32, #tpu.memory_space<vmem>>, %arg4: memref<1x14x14x128xf32, #tpu.memory_space<vmem>>, %arg5: memref<1x2x128xf32, #tpu.memory_space<vmem>>) attributes {dimension_semantics = [#tpu.dimension_semantics<parallel>], iteration_bounds = array<i64: 2>, scalar_prefetch = 0 : i64, scratch_operands = 0 : i64, tpu.core_type = #tpu.core_type<tc>, window_params = [{transform_indices = @transform_0, window_bounds = array<i64: 1, 16, 16, 4>}, {pipeline_mode = #tpu.pipeline_mode<synchronous>, transform_indices = @transform_1, window_bounds = array<i64: 36, 128>}, {pipeline_mode = #tpu.pipeline_mode<synchronous>, transform_indices = @transform_2, window_bounds = array<i64: 2, 4>}, {transform_indices = @transform_3, window_bounds = array<i64: 1, 14, 14, 128>}, {transform_indices = @transform_4, window_bounds = array<i64: 1, 2, 128>}]} {
    %c0 = arith.constant 0 : index
    %c0_0 = arith.constant 0 : index
    %c0_1 = arith.constant 0 : index
    %c0_2 = arith.constant 0 : index
    %0 = vector.load %arg1[%c0, %c0_0, %c0_1, %c0_2] : memref<1x16x16x4xf32, #tpu.memory_space<vmem>>, vector<1x16x16x4xf32>
    %1 = vector.shape_cast %0 : vector<1x16x16x4xf32> to vector<16x16x4xf32>
    %2 = vector.extract_strided_slice %1 {offsets = [0, 0, 0], sizes = [14, 14, 4], strides = [1, 1, 1]} : vector<16x16x4xf32> to vector<14x14x4xf32>
    %3 = vector.extract_strided_slice %1 {offsets = [0, 1, 0], sizes = [14, 14, 4], strides = [1, 1, 1]} : vector<16x16x4xf32> to vector<14x14x4xf32>
    %4 = vector.extract_strided_slice %1 {offsets = [0, 2, 0], sizes = [14, 14, 4], strides = [1, 1, 1]} : vector<16x16x4xf32> to vector<14x14x4xf32>
    %5 = vector.extract_strided_slice %1 {offsets = [1, 0, 0], sizes = [14, 14, 4], strides = [1, 1, 1]} : vector<16x16x4xf32> to vector<14x14x4xf32>
    %6 = vector.extract_strided_slice %1 {offsets = [1, 1, 0], sizes = [14, 14, 4], strides = [1, 1, 1]} : vector<16x16x4xf32> to vector<14x14x4xf32>
    %7 = vector.extract_strided_slice %1 {offsets = [1, 2, 0], sizes = [14, 14, 4], strides = [1, 1, 1]} : vector<16x16x4xf32> to vector<14x14x4xf32>
    %8 = vector.extract_strided_slice %1 {offsets = [2, 0, 0], sizes = [14, 14, 4], strides = [1, 1, 1]} : vector<16x16x4xf32> to vector<14x14x4xf32>
    %9 = vector.extract_strided_slice %1 {offsets = [2, 1, 0], sizes = [14, 14, 4], strides = [1, 1, 1]} : vector<16x16x4xf32> to vector<14x14x4xf32>
    %10 = vector.extract_strided_slice %1 {offsets = [2, 2, 0], sizes = [14, 14, 4], strides = [1, 1, 1]} : vector<16x16x4xf32> to vector<14x14x4xf32>
    %11 = tpu.concatenate %2, %3, %4, %5, %6, %7, %8, %9, %10 in 2 : vector<14x14x4xf32>, vector<14x14x4xf32>, vector<14x14x4xf32>, vector<14x14x4xf32>, vector<14x14x4xf32>, vector<14x14x4xf32>, vector<14x14x4xf32>, vector<14x14x4xf32>, vector<14x14x4xf32> -> vector<14x14x36xf32>
    %12 = vector.shape_cast %11 : vector<14x14x36xf32> to vector<196x36xf32>
    %13 = arith.truncf %12 : vector<196x36xf32> to vector<196x36xbf16>
    %c0_3 = arith.constant 0 : index
    %c0_4 = arith.constant 0 : index
    %14 = vector.load %arg2[%c0_3, %c0_4] : memref<36x128xbf16, #tpu.memory_space<vmem>>, vector<36x128xbf16>
    %cst = arith.constant dense<0.000000e+00> : vector<196x128xf32>
    %15 = tpu.matmul %13, %14, %cst {dimension_numbers = #tpu.dot_dimension_numbers<[1], [0], [0], [1], [0, 0, 1, 1], [], []>} : vector<196x36xbf16>, vector<36x128xbf16>, vector<196x128xf32> -> vector<196x128xf32>
    %16 = vector.shape_cast %15 : vector<196x128xf32> to vector<1x14x14x128xf32>
    %c0_5 = arith.constant 0 : index
    %c0_6 = arith.constant 0 : index
    %c0_7 = arith.constant 0 : index
    %c0_8 = arith.constant 0 : index
    %17 = vector.load %arg4[%c0_5, %c0_6, %c0_7, %c0_8] : memref<1x14x14x128xf32, #tpu.memory_space<vmem>>, vector<1x14x14x128xf32>
    tpu.vector_store %arg4[%c0_5, %c0_6, %c0_7, %c0_8], %16 {strides = array<i32>} : memref<1x14x14x128xf32, #tpu.memory_space<vmem>>, vector<1x14x14x128xf32>,
    %cst_9 = arith.constant dense<0.000000e+00> : vector<128xf32>
    %18 = vector.multi_reduction <add>, %15, %cst_9 [0] : vector<196x128xf32> to vector<128xf32>
    %19 = vector.shape_cast %18 : vector<128xf32> to vector<1x128xf32>
    %20 = arith.mulf %15, %15 : vector<196x128xf32>
    %cst_10 = arith.constant dense<0.000000e+00> : vector<128xf32>
    %21 = vector.multi_reduction <add>, %20, %cst_10 [0] : vector<196x128xf32> to vector<128xf32>
    %22 = vector.shape_cast %21 : vector<128xf32> to vector<1x128xf32>
    %23 = tpu.concatenate %19, %22 in 0 : vector<1x128xf32>, vector<1x128xf32> -> vector<2x128xf32>
    %24 = vector.shape_cast %23 : vector<2x128xf32> to vector<1x2x128xf32>
    %c0_11 = arith.constant 0 : index
    %c0_12 = arith.constant 0 : index
    %c0_13 = arith.constant 0 : index
    %25 = vector.load %arg5[%c0_11, %c0_12, %c0_13] : memref<1x2x128xf32, #tpu.memory_space<vmem>>, vector<1x2x128xf32>
    tpu.vector_store %arg5[%c0_11, %c0_12, %c0_13], %24 {strides = array<i32>} : memref<1x2x128xf32, #tpu.memory_space<vmem>>, vector<1x2x128xf32>,
    return
  }
  func.func @transform_0(%arg0: i32) -> (i32, i32, i32, i32) {
    %c0_i32 = arith.constant 0 : i32
    %c0_i32_0 = arith.constant 0 : i32
    %c0_i32_1 = arith.constant 0 : i32
    %c0_i32_2 = arith.constant 0 : i32
    return %arg0, %c0_i32, %c0_i32_0, %c0_i32_1 : i32, i32, i32, i32
  }
  func.func @transform_1(%arg0: i32) -> (i32, i32) {
    %c0_i32 = arith.constant 0 : i32
    %c0_i32_0 = arith.constant 0 : i32
    %c0_i32_1 = arith.constant 0 : i32
    return %c0_i32, %c0_i32_0 : i32, i32
  }
  func.func @transform_2(%arg0: i32) -> (i32, i32) {
    %c0_i32 = arith.constant 0 : i32
    %c0_i32_0 = arith.constant 0 : i32
    %c0_i32_1 = arith.constant 0 : i32
    return %c0_i32, %c0_i32_0 : i32, i32
  }
  func.func @transform_3(%arg0: i32) -> (i32, i32, i32, i32) {
    %c0_i32 = arith.constant 0 : i32
    %c0_i32_0 = arith.constant 0 : i32
    %c0_i32_1 = arith.constant 0 : i32
    %c0_i32_2 = arith.constant 0 : i32
    return %arg0, %c0_i32, %c0_i32_0, %c0_i32_1 : i32, i32, i32, i32
  }
  func.func @transform_4(%arg0: i32) -> (i32, i32, i32) {
    %c0_i32 = arith.constant 0 : i32
    %c0_i32_0 = arith.constant 0 : i32
    %c0_i32_1 = arith.constant 0 : i32
    return %arg0, %c0_i32, %c0_i32_0 : i32, i32, i32
  }
}

</mosaic_0001>

<llo_original>
// kernel: tpu_custom_call.1
$region0: #{tpu_custom_call.1}
  #allocation0 [shape = 'u32[]', space=smem, size = 0x4, offset = 0x4, fixed_abs, tag = 'smem constant byte address 0x4 - core index']
  #allocation1 [shape = 'u32[72,128]{1,0:T(1,128)}', space=vmem, size = 0x9000, scoped, tag = 'internal scratch']
  %s0 = inlined_call_operand.vmem [shape: f32[2,16,16,4], index: 0, kind: input, shape index: {}]
  %s1 = inlined_call_operand.vmem [shape: bf16[36,128], index: 1, kind: input, shape index: {}]
  %s2 = inlined_call_operand.vmem [shape: f32[2,4], index: 2, kind: input, shape index: {}]
  %s3 = inlined_call_operand.vmem [shape: f32[2,14,14,128], index: 3, kind: output, shape index: {0}]
  %s4 = inlined_call_operand.hbm [shape: f32[2,2,128], index: 4, kind: output, shape index: {1}]
  %5 = xla_tuple %s3, %s4
  %s6 = sld [smem:[#allocation0]]
  $region53: #{tpu_custom_call.1} parent=0
    _
  %s8 = ssub.s32 1, %s6
  %s9 = scalar_select 0, %s8, %s6
  $region1: #{tpu_custom_call.1} parent=0
    #allocation2 [shape = 'u8[2048]{0}', space=vmem, size = 0x800, scoped, tag = 'output window, operand 1']
    #allocation3 [shape = 's32[2]{0}', space=sflag, size = 0x8, scoped, tag = 'scoped memory for tpu_custom_call.1']
    %10 = vsyncpa [#allocation3], 0
    %s11 = scalar_lea.sflag [#allocation3], 1
    %12 = vsyncpa %s11, 0
    loop: start=0, step=1, limit=4
    $region2: #{tpu_custom_call.1} parent=1 // loop_pre_header
      _
    $region3: #{tpu_custom_call.1} parent=1 // loop_header
      %s14 = sphi 0, %s18
      %p15 = scmp.ge.s32.totalorder %s14, 4
      %s24 = sphi 0, %s26
      %s27 = sphi 0, %s24
      %s28 = sphi 0, %s27
      %s44 = sphi 0, %s28
      %s48 = sphi 0, %s48
      %s50 = sphi 0, %s48
      %s51 = sphi 0, %s50
      %s65 = sphi 0, %s51
      %s69 = sphi 0, %s69
      %s71 = sphi 0, %s69
      %s72 = sphi 0, %s71
      %s86 = sphi 0, %s72
      %s92 = sphi 0, %s94
      %s95 = sphi 0, %s92
      %s96 = sphi 0, %s95
      %s112 = sphi 0, %s96
      %s118 = sphi 0, %s120
      %s121 = sphi 0, %s118
      %s122 = sphi 0, %s121
      %s138 = sphi 0, %s122
    $region4: #{tpu_custom_call.1} parent=1 // loop_header_branch
      %17 = sbr.rel (%p15) target = $region8
    $region5: #{tpu_custom_call.1} parent=1 // loop_body
      %s19 = ssub.s32 %s14, 1
      %s20 = ssub.s32 %s14, 2
      %s21 = sadd.s32 %s14, 1
      %s22 = ssub.s32 %s14, %s21
      %p23 = scmp.eq.s32.totalorder %s22, 0
      %s25 = sadd.s32 %s24, 1
      %s26 = scalar_select %p23, %s24, %s25
      %p29 = pneg %p23
      %p30 = scmp.eq.s32.totalorder %s14, 1
      %p31 = por %p29, %p30
      %p32 = scmp.ne.s32.totalorder %s24, %s27
      %p33 = scmp.eq.s32.totalorder %s14, 0
      %p34 = por %p32, %p33
      %p35 = scmp.ne.s32.totalorder %s24, %s27
      %p36 = scmp.eq.s32.totalorder %s19, 1
      %p37 = por %p35, %p36
      %p38 = scmp.ne.s32.totalorder %s27, %s28
      %p39 = scmp.eq.s32.totalorder %s19, 0
      %p40 = por %p38, %p39
      %p41 = scmp.ne.s32.totalorder %s27, %s28
      %p42 = scmp.eq.s32.totalorder %s20, 1
      %p43 = por %p41, %p42
      %p45 = scmp.ne.s32.totalorder %s28, %s44
      %p46 = scmp.eq.s32.totalorder %s20, 0
      %p47 = por %p45, %p46
      %s49 = sadd.s32 %s48, 1
      %p52 = scmp.eq.s32.totalorder %s14, 1
      %p53 = scmp.ne.s32.totalorder %s48, %s50
      %p54 = scmp.eq.s32.totalorder %s14, 0
      %p55 = por %p53, %p54
      %p56 = scmp.ne.s32.totalorder %s48, %s50
      %p57 = scmp.eq.s32.totalorder %s19, 1
      %p58 = por %p56, %p57
      %p59 = scmp.ne.s32.totalorder %s50, %s51
      %p60 = scmp.eq.s32.totalorder %s19, 0
      %p61 = por %p59, %p60
      %p62 = scmp.ne.s32.totalorder %s50, %s51
      %p63 = scmp.eq.s32.totalorder %s20, 1
      %p64 = por %p62, %p63
      %p66 = scmp.ne.s32.totalorder %s51, %s65
      %p67 = scmp.eq.s32.totalorder %s20, 0
      %p68 = por %p66, %p67
      %s70 = sadd.s32 %s69, 1
      %p73 = scmp.eq.s32.totalorder %s14, 1
      %p74 = scmp.ne.s32.totalorder %s69, %s71
      %p75 = scmp.eq.s32.totalorder %s14, 0
      %p76 = por %p74, %p75
      %p77 = scmp.ne.s32.totalorder %s69, %s71
      %p78 = scmp.eq.s32.totalorder %s19, 1
      %p79 = por %p77, %p78
      %p80 = scmp.ne.s32.totalorder %s71, %s72
      %p81 = scmp.eq.s32.totalorder %s19, 0
      %p82 = por %p80, %p81
      %p83 = scmp.ne.s32.totalorder %s71, %s72
      %p84 = scmp.eq.s32.totalorder %s20, 1
      %p85 = por %p83, %p84
      %p87 = scmp.ne.s32.totalorder %s72, %s86
      %p88 = scmp.eq.s32.totalorder %s20, 0
      %p89 = por %p87, %p88
      %s90 = ssub.s32 %s14, %s21
      %p91 = scmp.eq.s32.totalorder %s90, 0
      %s93 = sadd.s32 %s92, 1
      %s94 = scalar_select %p91, %s92, %s93
      %p97 = pneg %p91
      %p98 = scmp.eq.s32.totalorder %s14, 1
      %p99 = por %p97, %p98
      %p100 = scmp.ne.s32.totalorder %s92, %s95
      %p101 = scmp.eq.s32.totalorder %s14, 0
      %p102 = por %p100, %p101
      %p103 = scmp.ne.s32.totalorder %s92, %s95
      %p104 = scmp.eq.s32.totalorder %s19, 1
      %p105 = por %p103, %p104
      %p106 = scmp.ne.s32.totalorder %s95, %s96
      %p107 = scmp.eq.s32.totalorder %s19, 0
      %p108 = por %p106, %p107
      %p109 = scmp.ne.s32.totalorder %s95, %s96
      %p110 = scmp.eq.s32.totalorder %s20, 1
      %p111 = por %p109, %p110
      %p113 = scmp.ne.s32.totalorder %s96, %s112
      %p114 = scmp.eq.s32.totalorder %s20, 0
      %p115 = por %p113, %p114
      %s116 = ssub.s32 %s14, %s21
      %p117 = scmp.eq.s32.totalorder %s116, 0
      %s119 = sadd.s32 %s118, 1
      %s120 = scalar_select %p117, %s118, %s119
      %p123 = pneg %p117
      %p124 = scmp.eq.s32.totalorder %s14, 1
      %p125 = por %p123, %p124
      %p126 = scmp.ne.s32.totalorder %s118, %s121
      %p127 = scmp.eq.s32.totalorder %s14, 0
      %p128 = por %p126, %p127
      %p129 = scmp.ne.s32.totalorder %s118, %s121
      %p130 = scmp.eq.s32.totalorder %s19, 1
      %p131 = por %p129, %p130
      %p132 = scmp.ne.s32.totalorder %s121, %s122
      %p133 = scmp.eq.s32.totalorder %s19, 0
      %p134 = por %p132, %p133
      %p135 = scmp.ne.s32.totalorder %s121, %s122
      %p136 = scmp.eq.s32.totalorder %s20, 1
      %p137 = por %p135, %p136
      %p139 = scmp.ne.s32.totalorder %s122, %s138
      %p140 = scmp.eq.s32.totalorder %s20, 0
      %p141 = por %p139, %p140
      %p142 = scmp.le.s32.totalorder 1, %s14
      %p143 = scmp.lt.s32.totalorder %s14, 3
      %p144 = pnand %p142, %p143
      %p145 = pneg %p144
      // Predicated region
      $region9: #{tpu_custom_call.1} parent=5 // pred_check
        _
      $region10: #{tpu_custom_call.1} parent=5 // pred_check_branch
        %147 = sbr.rel (%p144) target = $region12
      $region11: #{tpu_custom_call.1} parent=5 // pred_region
        %s148 = ssub.s32 %s14, 1
        // Predicated region
        $region13: #{tpu_custom_call.1} parent=11 // pred_check
          %p149 = pneg %p61
        $region14: #{tpu_custom_call.1} parent=11 // pred_check_branch
          %151 = sbr.rel (%p149) target = $region16
        $region15: #{tpu_custom_call.1} parent=11 // pred_region
          _
        $region16: #{tpu_custom_call.1} parent=11 // pred_fallthru
          _
        // Predicated region
        $region17: #{tpu_custom_call.1} parent=11 // pred_check
          %p152 = pneg %p82
        $region18: #{tpu_custom_call.1} parent=11 // pred_check_branch
          %154 = sbr.rel (%p152) target = $region20
        $region19: #{tpu_custom_call.1} parent=11 // pred_region
          _
        $region20: #{tpu_custom_call.1} parent=11 // pred_fallthru
          _
      $region12: #{tpu_custom_call.1} parent=5 // pred_fallthru
        _
      %p155 = scmp.lt.s32.totalorder %s14, 2
      // Predicated region
      $region21: #{tpu_custom_call.1} parent=5 // pred_check
        %p156 = pneg %p155
      $region22: #{tpu_custom_call.1} parent=5 // pred_check_branch
        %158 = sbr.rel (%p156) target = $region24
      $region23: #{tpu_custom_call.1} parent=5 // pred_region
        // Predicated region
        $region25: #{tpu_custom_call.1} parent=23 // pred_check
          %p159 = pneg %p34
        $region26: #{tpu_custom_call.1} parent=23 // pred_check_branch
          %161 = sbr.rel (%p159) target = $region28
        $region27: #{tpu_custom_call.1} parent=23 // pred_region
          %p162 = scmp.lt.s32.totalorder %s14, 1
          %s163 = scalar_select %p162, %s14, 1
          %s164 = smul.addr %s163, 32
          %s165 = smul.addr %s164, 8
          %s166 = scalar_lea.vmem %s0, %s165
        $region28: #{tpu_custom_call.1} parent=23 // pred_fallthru
          _
      $region24: #{tpu_custom_call.1} parent=5 // pred_fallthru
        _
      %p167 = scmp.le.s32.totalorder 1, %s14
      %p168 = scmp.lt.s32.totalorder %s14, 3
      %p169 = pnand %p167, %p168
      %p170 = pneg %p169
      // Predicated region
      $region29: #{tpu_custom_call.1} parent=5 // pred_check
        _
      $region30: #{tpu_custom_call.1} parent=5 // pred_check_branch
        %172 = sbr.rel (%p169) target = $region32
      $region31: #{tpu_custom_call.1} parent=5 // pred_region
        %s173 = ssub.s32 %s14, 1
        %p174 = scmp.lt.s32.totalorder %s19, 1
        %s175 = scalar_select %p174, %s19, 1
        %s176 = smul.addr %s175, 32
        %s177 = smul.addr %s176, 8
        %s178 = scalar_lea.vmem %s0, %s177
        %p179 = pneg %p40
        %p180 = pneg %p37
        %p181 = pneg %p61
        %p182 = pneg %p58
        %p183 = pneg %p82
        %p184 = pneg %p79
        %p185 = pneg %p108
        %p186 = pneg %p105
        %p187 = scmp.lt.s32.totalorder %s19, 1
        %s188 = scalar_select %p187, %s19, 1
        %s189 = smul.addr %s188, 28
        %s190 = smul.addr %s189, 8
        %s191 = scalar_lea.vmem %s3, %s190
        %p192 = pneg %p134
        %p193 = pneg %p131
        %s194 = sand.u32 %s121, 1
        %s195 = scalar_lea.sflag [#allocation3], %s194
        %s196 = sand.u32 %s121, 1
        %s197 = smul.addr %s196, 2
        %s198 = scalar_lea.vmem [#allocation2], %s197
        %p199 = scmp.lt.s32.totalorder %s19, 1
        %s200 = scalar_select %p199, %s19, 1
        %s201 = smul.addr %s200, 32
        %s202 = smul.addr %s201, 8
        %s203 = scalar_lea.vmem %s0, %s202
        %p204 = scmp.lt.s32.totalorder %s19, 1
        %s205 = scalar_select %p204, %s19, 1
        %s206 = smul.addr %s205, 28
        %s207 = smul.addr %s206, 8
        %s208 = scalar_lea.vmem %s3, %s207
        %v210 = vld [vmem:[%s203] sm:$0xff]
        %v211 = vld [vmem:[%s203 + $0x8] sm:$0xff]
        %v212 = vld [vmem:[%s203 + $0x10] sm:$0xff]
        %v213 = vld [vmem:[%s203 + $0x18] sm:$0xff]
        %v214 = vld [vmem:[%s203 + $0x20] sm:$0xff]
        %v215 = vld [vmem:[%s203 + $0x28] sm:$0xff]
        %v216 = vld [vmem:[%s203 + $0x30] sm:$0xff]
        %v217 = vld [vmem:[%s203 + $0x38] sm:$0xff]
        %v218 = vld [vmem:[%s203 + $0x40] sm:$0xff]
        %v219 = vld [vmem:[%s203 + $0x48] sm:$0xff]
        %v220 = vld [vmem:[%s203 + $0x50] sm:$0xff]
        %v221 = vld [vmem:[%s203 + $0x58] sm:$0xff]
        %v222 = vld [vmem:[%s203 + $0x60] sm:$0xff]
        %v223 = vld [vmem:[%s203 + $0x68] sm:$0xff]
        %v224 = vld [vmem:[%s203 + $0x70] sm:$0xff]
        %v225 = vld [vmem:[%s203 + $0x78] sm:$0xff]
        %v226 = vld [vmem:[%s203 + $0x80] sm:$0xff]
        %v227 = vld [vmem:[%s203 + $0x88] sm:$0xff]
        %v228 = vld [vmem:[%s203 + $0x90] sm:$0xff]
        %v229 = vld [vmem:[%s203 + $0x98] sm:$0xff]
        %v230 = vld [vmem:[%s203 + $0xa0] sm:$0xff]
        %v231 = vld [vmem:[%s203 + $0xa8] sm:$0xff]
        %v232 = vld [vmem:[%s203 + $0xb0] sm:$0xff]
        %v233 = vld [vmem:[%s203 + $0xb8] sm:$0xff]
        %v234 = vld [vmem:[%s203 + $0xc0] sm:$0xff]
        %v235 = vld [vmem:[%s203 + $0xc8] sm:$0xff]
        %v236 = vld [vmem:[%s203 + $0xd0] sm:$0xff]
        %v237 = vld [vmem:[%s203 + $0xd8] sm:$0xff]
        %v238 = vld [vmem:[%s203 + $0xe0] sm:$0xff]
        %v239 = vld [vmem:[%s203 + $0xe8] sm:$0xff]
        %v240 = vld [vmem:[%s203 + $0xf0] sm:$0xff]
        %v241 = vld [vmem:[%s203 + $0xf8] sm:$0xff]
        %vm270 = vcmask 1046528
        %v271 = vrot.slane %v210, 1
        %v272 = vrot.slane %v211, 1
        %v273 = vsel %vm270, %v271, %v272
        %v274 = vrot.slane %v212, 1
        %v275 = vrot.slane %v213, 1
        %v276 = vsel %vm270, %v274, %v275
        %v277 = vrot.slane %v214, 1
        %v278 = vrot.slane %v215, 1
        %v279 = vsel %vm270, %v277, %v278
        %v280 = vrot.slane %v216, 1
        %v281 = vrot.slane %v217, 1
        %v282 = vsel %vm270, %v280, %v281
        %v283 = vrot.slane %v218, 1
        %v284 = vrot.slane %v219, 1
        %v285 = vsel %vm270, %v283, %v284
        %v286 = vrot.slane %v220, 1
        %v287 = vrot.slane %v221, 1
        %v288 = vsel %vm270, %v286, %v287
        %v289 = vrot.slane %v222, 1
        %v290 = vrot.slane %v223, 1
        %v291 = vsel %vm270, %v289, %v290
        %v292 = vrot.slane %v224, 1
        %v293 = vrot.slane %v225, 1
        %v294 = vsel %vm270, %v292, %v293
        %v295 = vrot.slane %v226, 1
        %v296 = vrot.slane %v227, 1
        %v297 = vsel %vm270, %v295, %v296
        %v298 = vrot.slane %v228, 1
        %v299 = vrot.slane %v229, 1
        %v300 = vsel %vm270, %v298, %v299
        %v301 = vrot.slane %v230, 1
        %v302 = vrot.slane %v231, 1
        %v303 = vsel %vm270, %v301, %v302
        %v304 = vrot.slane %v232, 1
        %v305 = vrot.slane %v233, 1
        %v306 = vsel %vm270, %v304, %v305
        %v307 = vrot.slane %v234, 1
        %v308 = vrot.slane %v235, 1
        %v309 = vsel %vm270, %v307, %v308
        %v310 = vrot.slane %v236, 1
        %v311 = vrot.slane %v237, 1
        %v312 = vsel %vm270, %v310, %v311
        %313 = vrot.lane.b32.xlu0 %v273, 4
        %v314 = vpop.permute.xlu0 %313
        %315 = vrot.lane.b32.xlu0 %v272, 4
        %v316 = vpop.permute.xlu0 %315
        %317 = vrot.lane.b32.xlu0 %v276, 4
        %v318 = vpop.permute.xlu0 %317
        %319 = vrot.lane.b32.xlu0 %v275, 4
        %v320 = vpop.permute.xlu0 %319
        %321 = vrot.lane.b32.xlu0 %v279, 4
        %v322 = vpop.permute.xlu0 %321
        %323 = vrot.lane.b32.xlu0 %v278, 4
        %v324 = vpop.permute.xlu0 %323
        %325 = vrot.lane.b32.xlu0 %v282, 4
        %v326 = vpop.permute.xlu0 %325
        %327 = vrot.lane.b32.xlu0 %v281, 4
        %v328 = vpop.permute.xlu0 %327
        %329 = vrot.lane.b32.xlu0 %v285, 4
        %v330 = vpop.permute.xlu0 %329
        %331 = vrot.lane.b32.xlu0 %v284, 4
        %v332 = vpop.permute.xlu0 %331
        %333 = vrot.lane.b32.xlu0 %v288, 4
        %v334 = vpop.permute.xlu0 %333
        %335 = vrot.lane.b32.xlu0 %v287, 4
        %v336 = vpop.permute.xlu0 %335
        %337 = vrot.lane.b32.xlu0 %v291, 4
        %v338 = vpop.permute.xlu0 %337
        %339 = vrot.lane.b32.xlu0 %v290, 4
        %v340 = vpop.permute.xlu0 %339
        %341 = vrot.lane.b32.xlu0 %v294, 4
        %v342 = vpop.permute.xlu0 %341
        %343 = vrot.lane.b32.xlu0 %v293, 4
        %v344 = vpop.permute.xlu0 %343
        %345 = vrot.lane.b32.xlu0 %v297, 4
        %v346 = vpop.permute.xlu0 %345
        %347 = vrot.lane.b32.xlu0 %v296, 4
        %v348 = vpop.permute.xlu0 %347
        %349 = vrot.lane.b32.xlu0 %v300, 4
        %v350 = vpop.permute.xlu0 %349
        %351 = vrot.lane.b32.xlu0 %v299, 4
        %v352 = vpop.permute.xlu0 %351
        %353 = vrot.lane.b32.xlu0 %v303, 4
        %v354 = vpop.permute.xlu0 %353
        %355 = vrot.lane.b32.xlu0 %v302, 4
        %v356 = vpop.permute.xlu0 %355
        %357 = vrot.lane.b32.xlu0 %v306, 4
        %v358 = vpop.permute.xlu0 %357
        %359 = vrot.lane.b32.xlu0 %v305, 4
        %v360 = vpop.permute.xlu0 %359
        %361 = vrot.lane.b32.xlu0 %v309, 4
        %v362 = vpop.permute.xlu0 %361
        %363 = vrot.lane.b32.xlu0 %v308, 4
        %v364 = vpop.permute.xlu0 %363
        %365 = vrot.lane.b32.xlu0 %v312, 4
        %v366 = vpop.permute.xlu0 %365
        %367 = vrot.lane.b32.xlu0 %v311, 4
        %v368 = vpop.permute.xlu0 %367
        %vm397 = vcmask 1045504
        %v398 = vrot.slane %v210, 2
        %v399 = vrot.slane %v211, 2
        %v400 = vsel %vm397, %v398, %v399
        %v401 = vrot.slane %v212, 2
        %v402 = vrot.slane %v213, 2
        %v403 = vsel %vm397, %v401, %v402
        %v404 = vrot.slane %v214, 2
        %v405 = vrot.slane %v215, 2
        %v406 = vsel %vm397, %v404, %v405
        %v407 = vrot.slane %v216, 2
        %v408 = vrot.slane %v217, 2
        %v409 = vsel %vm397, %v407, %v408
        %v410 = vrot.slane %v218, 2
        %v411 = vrot.slane %v219, 2
        %v412 = vsel %vm397, %v410, %v411
        %v413 = vrot.slane %v220, 2
        %v414 = vrot.slane %v221, 2
        %v415 = vsel %vm397, %v413, %v414
        %v416 = vrot.slane %v222, 2
        %v417 = vrot.slane %v223, 2
        %v418 = vsel %vm397, %v416, %v417
        %v419 = vrot.slane %v224, 2
        %v420 = vrot.slane %v225, 2
        %v421 = vsel %vm397, %v419, %v420
        %v422 = vrot.slane %v226, 2
        %v423 = vrot.slane %v227, 2
        %v424 = vsel %vm397, %v422, %v423
        %v425 = vrot.slane %v228, 2
        %v426 = vrot.slane %v229, 2
        %v427 = vsel %vm397, %v425, %v426
        %v428 = vrot.slane %v230, 2
        %v429 = vrot.slane %v231, 2
        %v430 = vsel %vm397, %v428, %v429
        %v431 = vrot.slane %v232, 2
        %v432 = vrot.slane %v233, 2
        %v433 = vsel %vm397, %v431, %v432
        %v434 = vrot.slane %v234, 2
        %v435 = vrot.slane %v235, 2
        %v436 = vsel %vm397, %v434, %v435
        %v437 = vrot.slane %v236, 2
        %v438 = vrot.slane %v237, 2
        %v439 = vsel %vm397, %v437, %v438
        %440 = vrot.lane.b32.xlu0 %v400, 8
        %v441 = vpop.permute.xlu0 %440
        %442 = vrot.lane.b32.xlu0 %v399, 8
        %v443 = vpop.permute.xlu0 %442
        %444 = vrot.lane.b32.xlu0 %v403, 8
        %v445 = vpop.permute.xlu0 %444
        %446 = vrot.lane.b32.xlu0 %v402, 8
        %v447 = vpop.permute.xlu0 %446
        %448 = vrot.lane.b32.xlu0 %v406, 8
        %v449 = vpop.permute.xlu0 %448
        %450 = vrot.lane.b32.xlu0 %v405, 8
        %v451 = vpop.permute.xlu0 %450
        %452 = vrot.lane.b32.xlu0 %v409, 8
        %v453 = vpop.permute.xlu0 %452
        %454 = vrot.lane.b32.xlu0 %v408, 8
        %v455 = vpop.permute.xlu0 %454
        %456 = vrot.lane.b32.xlu0 %v412, 8
        %v457 = vpop.permute.xlu0 %456
        %458 = vrot.lane.b32.xlu0 %v411, 8
        %v459 = vpop.permute.xlu0 %458
        %460 = vrot.lane.b32.xlu0 %v415, 8
        %v461 = vpop.permute.xlu0 %460
        %462 = vrot.lane.b32.xlu0 %v414, 8
        %v463 = vpop.permute.xlu0 %462
        %464 = vrot.lane.b32.xlu0 %v418, 8
        %v465 = vpop.permute.xlu0 %464
        %466 = vrot.lane.b32.xlu0 %v417, 8
        %v467 = vpop.permute.xlu0 %466
        %468 = vrot.lane.b32.xlu0 %v421, 8
        %v469 = vpop.permute.xlu0 %468
        %470 = vrot.lane.b32.xlu0 %v420, 8
        %v471 = vpop.permute.xlu0 %470
        %472 = vrot.lane.b32.xlu0 %v424, 8
        %v473 = vpop.permute.xlu0 %472
        %474 = vrot.lane.b32.xlu0 %v423, 8
        %v475 = vpop.permute.xlu0 %474
        %476 = vrot.lane.b32.xlu0 %v427, 8
        %v477 = vpop.permute.xlu0 %476
        %478 = vrot.lane.b32.xlu0 %v426, 8
        %v479 = vpop.permute.xlu0 %478
        %480 = vrot.lane.b32.xlu0 %v430, 8
        %v481 = vpop.permute.xlu0 %480
        %482 = vrot.lane.b32.xlu0 %v429, 8
        %v483 = vpop.permute.xlu0 %482
        %484 = vrot.lane.b32.xlu0 %v433, 8
        %v485 = vpop.permute.xlu0 %484
        %486 = vrot.lane.b32.xlu0 %v432, 8
        %v487 = vpop.permute.xlu0 %486
        %488 = vrot.lane.b32.xlu0 %v436, 8
        %v489 = vpop.permute.xlu0 %488
        %490 = vrot.lane.b32.xlu0 %v435, 8
        %v491 = vpop.permute.xlu0 %490
        %492 = vrot.lane.b32.xlu0 %v439, 8
        %v493 = vpop.permute.xlu0 %492
        %494 = vrot.lane.b32.xlu0 %v438, 8
        %v495 = vpop.permute.xlu0 %494
        %526 = vrot.lane.b32.xlu0 %v212, 12
        %v527 = vpop.permute.xlu0 %526
        %528 = vrot.lane.b32.xlu0 %v213, 12
        %v529 = vpop.permute.xlu0 %528
        %530 = vrot.lane.b32.xlu0 %v214, 12
        %v531 = vpop.permute.xlu0 %530
        %532 = vrot.lane.b32.xlu0 %v215, 12
        %v533 = vpop.permute.xlu0 %532
        %534 = vrot.lane.b32.xlu0 %v216, 12
        %v535 = vpop.permute.xlu0 %534
        %536 = vrot.lane.b32.xlu0 %v217, 12
        %v537 = vpop.permute.xlu0 %536
        %538 = vrot.lane.b32.xlu0 %v218, 12
        %v539 = vpop.permute.xlu0 %538
        %540 = vrot.lane.b32.xlu0 %v219, 12
        %v541 = vpop.permute.xlu0 %540
        %542 = vrot.lane.b32.xlu0 %v220, 12
        %v543 = vpop.permute.xlu0 %542
        %544 = vrot.lane.b32.xlu0 %v221, 12
        %v545 = vpop.permute.xlu0 %544
        %546 = vrot.lane.b32.xlu0 %v222, 12
        %v547 = vpop.permute.xlu0 %546
        %548 = vrot.lane.b32.xlu0 %v223, 12
        %v549 = vpop.permute.xlu0 %548
        %550 = vrot.lane.b32.xlu0 %v224, 12
        %v551 = vpop.permute.xlu0 %550
        %552 = vrot.lane.b32.xlu0 %v225, 12
        %v553 = vpop.permute.xlu0 %552
        %554 = vrot.lane.b32.xlu0 %v226, 12
        %v555 = vpop.permute.xlu0 %554
        %556 = vrot.lane.b32.xlu0 %v227, 12
        %v557 = vpop.permute.xlu0 %556
        %558 = vrot.lane.b32.xlu0 %v228, 12
        %v559 = vpop.permute.xlu0 %558
        %560 = vrot.lane.b32.xlu0 %v229, 12
        %v561 = vpop.permute.xlu0 %560
        %562 = vrot.lane.b32.xlu0 %v230, 12
        %v563 = vpop.permute.xlu0 %562
        %564 = vrot.lane.b32.xlu0 %v231, 12
        %v565 = vpop.permute.xlu0 %564
        %566 = vrot.lane.b32.xlu0 %v232, 12
        %v567 = vpop.permute.xlu0 %566
        %568 = vrot.lane.b32.xlu0 %v233, 12
        %v569 = vpop.permute.xlu0 %568
        %570 = vrot.lane.b32.xlu0 %v234, 12
        %v571 = vpop.permute.xlu0 %570
        %572 = vrot.lane.b32.xlu0 %v235, 12
        %v573 = vpop.permute.xlu0 %572
        %574 = vrot.lane.b32.xlu0 %v236, 12
        %v575 = vpop.permute.xlu0 %574
        %576 = vrot.lane.b32.xlu0 %v237, 12
        %v577 = vpop.permute.xlu0 %576
        %578 = vrot.lane.b32.xlu0 %v238, 12
        %v579 = vpop.permute.xlu0 %578
        %580 = vrot.lane.b32.xlu0 %v239, 12
        %v581 = vpop.permute.xlu0 %580
        %v610 = vrot.slane %v238, 1
        %v611 = vrot.slane %v239, 1
        %v612 = vsel %vm270, %v610, %v611
        %613 = vrot.lane.b32.xlu0 %v276, 16
        %v614 = vpop.permute.xlu0 %613
        %615 = vrot.lane.b32.xlu0 %v275, 16
        %v616 = vpop.permute.xlu0 %615
        %617 = vrot.lane.b32.xlu0 %v279, 16
        %v618 = vpop.permute.xlu0 %617
        %619 = vrot.lane.b32.xlu0 %v278, 16
        %v620 = vpop.permute.xlu0 %619
        %621 = vrot.lane.b32.xlu0 %v282, 16
        %v622 = vpop.permute.xlu0 %621
        %623 = vrot.lane.b32.xlu0 %v281, 16
        %v624 = vpop.permute.xlu0 %623
        %625 = vrot.lane.b32.xlu0 %v285, 16
        %v626 = vpop.permute.xlu0 %625
        %627 = vrot.lane.b32.xlu0 %v284, 16
        %v628 = vpop.permute.xlu0 %627
        %629 = vrot.lane.b32.xlu0 %v288, 16
        %v630 = vpop.permute.xlu0 %629
        %631 = vrot.lane.b32.xlu0 %v287, 16
        %v632 = vpop.permute.xlu0 %631
        %633 = vrot.lane.b32.xlu0 %v291, 16
        %v634 = vpop.permute.xlu0 %633
        %635 = vrot.lane.b32.xlu0 %v290, 16
        %v636 = vpop.permute.xlu0 %635
        %637 = vrot.lane.b32.xlu0 %v294, 16
        %v638 = vpop.permute.xlu0 %637
        %639 = vrot.lane.b32.xlu0 %v293, 16
        %v640 = vpop.permute.xlu0 %639
        %641 = vrot.lane.b32.xlu0 %v297, 16
        %v642 = vpop.permute.xlu0 %641
        %643 = vrot.lane.b32.xlu0 %v296, 16
        %v644 = vpop.permute.xlu0 %643
        %645 = vrot.lane.b32.xlu0 %v300, 16
        %v646 = vpop.permute.xlu0 %645
        %647 = vrot.lane.b32.xlu0 %v299, 16
        %v648 = vpop.permute.xlu0 %647
        %649 = vrot.lane.b32.xlu0 %v303, 16
        %v650 = vpop.permute.xlu0 %649
        %651 = vrot.lane.b32.xlu0 %v302, 16
        %v652 = vpop.permute.xlu0 %651
        %653 = vrot.lane.b32.xlu0 %v306, 16
        %v654 = vpop.permute.xlu0 %653
        %655 = vrot.lane.b32.xlu0 %v305, 16
        %v656 = vpop.permute.xlu0 %655
        %657 = vrot.lane.b32.xlu0 %v309, 16
        %v658 = vpop.permute.xlu0 %657
        %659 = vrot.lane.b32.xlu0 %v308, 16
        %v660 = vpop.permute.xlu0 %659
        %661 = vrot.lane.b32.xlu0 %v312, 16
        %v662 = vpop.permute.xlu0 %661
        %663 = vrot.lane.b32.xlu0 %v311, 16
        %v664 = vpop.permute.xlu0 %663
        %665 = vrot.lane.b32.xlu0 %v612, 16
        %v666 = vpop.permute.xlu0 %665
        %667 = vrot.lane.b32.xlu0 %v611, 16
        %v668 = vpop.permute.xlu0 %667
        %v697 = vrot.slane %v238, 2
        %v698 = vrot.slane %v239, 2
        %v699 = vsel %vm397, %v697, %v698
        %700 = vrot.lane.b32.xlu0 %v403, 20
        %v701 = vpop.permute.xlu0 %700
        %702 = vrot.lane.b32.xlu0 %v402, 20
        %v703 = vpop.permute.xlu0 %702
        %704 = vrot.lane.b32.xlu0 %v406, 20
        %v705 = vpop.permute.xlu0 %704
        %706 = vrot.lane.b32.xlu0 %v405, 20
        %v707 = vpop.permute.xlu0 %706
        %708 = vrot.lane.b32.xlu0 %v409, 20
        %v709 = vpop.permute.xlu0 %708
        %710 = vrot.lane.b32.xlu0 %v408, 20
        %v711 = vpop.permute.xlu0 %710
        %712 = vrot.lane.b32.xlu0 %v412, 20
        %v713 = vpop.permute.xlu0 %712
        %714 = vrot.lane.b32.xlu0 %v411, 20
        %v715 = vpop.permute.xlu0 %714
        %716 = vrot.lane.b32.xlu0 %v415, 20
        %v717 = vpop.permute.xlu0 %716
        %718 = vrot.lane.b32.xlu0 %v414, 20
        %v719 = vpop.permute.xlu0 %718
        %720 = vrot.lane.b32.xlu0 %v418, 20
        %v721 = vpop.permute.xlu0 %720
        %722 = vrot.lane.b32.xlu0 %v417, 20
        %v723 = vpop.permute.xlu0 %722
        %724 = vrot.lane.b32.xlu0 %v421, 20
        %v725 = vpop.permute.xlu0 %724
        %726 = vrot.lane.b32.xlu0 %v420, 20
        %v727 = vpop.permute.xlu0 %726
        %728 = vrot.lane.b32.xlu0 %v424, 20
        %v729 = vpop.permute.xlu0 %728
        %730 = vrot.lane.b32.xlu0 %v423, 20
        %v731 = vpop.permute.xlu0 %730
        %732 = vrot.lane.b32.xlu0 %v427, 20
        %v733 = vpop.permute.xlu0 %732
        %734 = vrot.lane.b32.xlu0 %v426, 20
        %v735 = vpop.permute.xlu0 %734
        %736 = vrot.lane.b32.xlu0 %v430, 20
        %v737 = vpop.permute.xlu0 %736
        %738 = vrot.lane.b32.xlu0 %v429, 20
        %v739 = vpop.permute.xlu0 %738
        %740 = vrot.lane.b32.xlu0 %v433, 20
        %v741 = vpop.permute.xlu0 %740
        %742 = vrot.lane.b32.xlu0 %v432, 20
        %v743 = vpop.permute.xlu0 %742
        %744 = vrot.lane.b32.xlu0 %v436, 20
        %v745 = vpop.permute.xlu0 %744
        %746 = vrot.lane.b32.xlu0 %v435, 20
        %v747 = vpop.permute.xlu0 %746
        %748 = vrot.lane.b32.xlu0 %v439, 20
        %v749 = vpop.permute.xlu0 %748
        %750 = vrot.lane.b32.xlu0 %v438, 20
        %v751 = vpop.permute.xlu0 %750
        %752 = vrot.lane.b32.xlu0 %v699, 20
        %v753 = vpop.permute.xlu0 %752
        %754 = vrot.lane.b32.xlu0 %v698, 20
        %v755 = vpop.permute.xlu0 %754
        %786 = vrot.lane.b32.xlu0 %v214, 24
        %v787 = vpop.permute.xlu0 %786
        %788 = vrot.lane.b32.xlu0 %v215, 24
        %v789 = vpop.permute.xlu0 %788
        %790 = vrot.lane.b32.xlu0 %v216, 24
        %v791 = vpop.permute.xlu0 %790
        %792 = vrot.lane.b32.xlu0 %v217, 24
        %v793 = vpop.permute.xlu0 %792
        %794 = vrot.lane.b32.xlu0 %v218, 24
        %v795 = vpop.permute.xlu0 %794
        %796 = vrot.lane.b32.xlu0 %v219, 24
        %v797 = vpop.permute.xlu0 %796
        %798 = vrot.lane.b32.xlu0 %v220, 24
        %v799 = vpop.permute.xlu0 %798
        %800 = vrot.lane.b32.xlu0 %v221, 24
        %v801 = vpop.permute.xlu0 %800
        %802 = vrot.lane.b32.xlu0 %v222, 24
        %v803 = vpop.permute.xlu0 %802
        %804 = vrot.lane.b32.xlu0 %v223, 24
        %v805 = vpop.permute.xlu0 %804
        %806 = vrot.lane.b32.xlu0 %v224, 24
        %v807 = vpop.permute.xlu0 %806
        %808 = vrot.lane.b32.xlu0 %v225, 24
        %v809 = vpop.permute.xlu0 %808
        %810 = vrot.lane.b32.xlu0 %v226, 24
        %v811 = vpop.permute.xlu0 %810
        %812 = vrot.lane.b32.xlu0 %v227, 24
        %v813 = vpop.permute.xlu0 %812
        %814 = vrot.lane.b32.xlu0 %v228, 24
        %v815 = vpop.permute.xlu0 %814
        %816 = vrot.lane.b32.xlu0 %v229, 24
        %v817 = vpop.permute.xlu0 %816
        %818 = vrot.lane.b32.xlu0 %v230, 24
        %v819 = vpop.permute.xlu0 %818
        %820 = vrot.lane.b32.xlu0 %v231, 24
        %v821 = vpop.permute.xlu0 %820
        %822 = vrot.lane.b32.xlu0 %v232, 24
        %v823 = vpop.permute.xlu0 %822
        %824 = vrot.lane.b32.xlu0 %v233, 24
        %v825 = vpop.permute.xlu0 %824
        %826 = vrot.lane.b32.xlu0 %v234, 24
        %v827 = vpop.permute.xlu0 %826
        %828 = vrot.lane.b32.xlu0 %v235, 24
        %v829 = vpop.permute.xlu0 %828
        %830 = vrot.lane.b32.xlu0 %v236, 24
        %v831 = vpop.permute.xlu0 %830
        %832 = vrot.lane.b32.xlu0 %v237, 24
        %v833 = vpop.permute.xlu0 %832
        %834 = vrot.lane.b32.xlu0 %v238, 24
        %v835 = vpop.permute.xlu0 %834
        %836 = vrot.lane.b32.xlu0 %v239, 24
        %v837 = vpop.permute.xlu0 %836
        %838 = vrot.lane.b32.xlu0 %v240, 24
        %v839 = vpop.permute.xlu0 %838
        %840 = vrot.lane.b32.xlu0 %v241, 24
        %v841 = vpop.permute.xlu0 %840
        %v870 = vrot.slane %v240, 1
        %v871 = vrot.slane %v241, 1
        %v872 = vsel %vm270, %v870, %v871
        %873 = vrot.lane.b32.xlu0 %v279, 28
        %v874 = vpop.permute.xlu0 %873
        %875 = vrot.lane.b32.xlu0 %v278, 28
        %v876 = vpop.permute.xlu0 %875
        %877 = vrot.lane.b32.xlu0 %v282, 28
        %v878 = vpop.permute.xlu0 %877
        %879 = vrot.lane.b32.xlu0 %v281, 28
        %v880 = vpop.permute.xlu0 %879
        %881 = vrot.lane.b32.xlu0 %v285, 28
        %v882 = vpop.permute.xlu0 %881
        %883 = vrot.lane.b32.xlu0 %v284, 28
        %v884 = vpop.permute.xlu0 %883
        %885 = vrot.lane.b32.xlu0 %v288, 28
        %v886 = vpop.permute.xlu0 %885
        %887 = vrot.lane.b32.xlu0 %v287, 28
        %v888 = vpop.permute.xlu0 %887
        %889 = vrot.lane.b32.xlu0 %v291, 28
        %v890 = vpop.permute.xlu0 %889
        %891 = vrot.lane.b32.xlu0 %v290, 28
        %v892 = vpop.permute.xlu0 %891
        %893 = vrot.lane.b32.xlu0 %v294, 28
        %v894 = vpop.permute.xlu0 %893
        %895 = vrot.lane.b32.xlu0 %v293, 28
        %v896 = vpop.permute.xlu0 %895
        %897 = vrot.lane.b32.xlu0 %v297, 28
        %v898 = vpop.permute.xlu0 %897
        %899 = vrot.lane.b32.xlu0 %v296, 28
        %v900 = vpop.permute.xlu0 %899
        %901 = vrot.lane.b32.xlu0 %v300, 28
        %v902 = vpop.permute.xlu0 %901
        %903 = vrot.lane.b32.xlu0 %v299, 28
        %v904 = vpop.permute.xlu0 %903
        %905 = vrot.lane.b32.xlu0 %v303, 28
        %v906 = vpop.permute.xlu0 %905
        %907 = vrot.lane.b32.xlu0 %v302, 28
        %v908 = vpop.permute.xlu0 %907
        %909 = vrot.lane.b32.xlu0 %v306, 28
        %v910 = vpop.permute.xlu0 %909
        %911 = vrot.lane.b32.xlu0 %v305, 28
        %v912 = vpop.permute.xlu0 %911
        %913 = vrot.lane.b32.xlu0 %v309, 28
        %v914 = vpop.permute.xlu0 %913
        %915 = vrot.lane.b32.xlu0 %v308, 28
        %v916 = vpop.permute.xlu0 %915
        %917 = vrot.lane.b32.xlu0 %v312, 28
        %v918 = vpop.permute.xlu0 %917
        %919 = vrot.lane.b32.xlu0 %v311, 28
        %v920 = vpop.permute.xlu0 %919
        %921 = vrot.lane.b32.xlu0 %v612, 28
        %v922 = vpop.permute.xlu0 %921
        %923 = vrot.lane.b32.xlu0 %v611, 28
        %v924 = vpop.permute.xlu0 %923
        %925 = vrot.lane.b32.xlu0 %v872, 28
        %v926 = vpop.permute.xlu0 %925
        %927 = vrot.lane.b32.xlu0 %v871, 28
        %v928 = vpop.permute.xlu0 %927
        %v957 = vrot.slane %v240, 2
        %v958 = vrot.slane %v241, 2
        %v959 = vsel %vm397, %v957, %v958
        %960 = vrot.lane.b32.xlu0 %v406, 32
        %v961 = vpop.permute.xlu0 %960
        %962 = vrot.lane.b32.xlu0 %v405, 32
        %v963 = vpop.permute.xlu0 %962
        %964 = vrot.lane.b32.xlu0 %v409, 32
        %v965 = vpop.permute.xlu0 %964
        %966 = vrot.lane.b32.xlu0 %v408, 32
        %v967 = vpop.permute.xlu0 %966
        %968 = vrot.lane.b32.xlu0 %v412, 32
        %v969 = vpop.permute.xlu0 %968
        %970 = vrot.lane.b32.xlu0 %v411, 32
        %v971 = vpop.permute.xlu0 %970
        %972 = vrot.lane.b32.xlu0 %v415, 32
        %v973 = vpop.permute.xlu0 %972
        %974 = vrot.lane.b32.xlu0 %v414, 32
        %v975 = vpop.permute.xlu0 %974
        %976 = vrot.lane.b32.xlu0 %v418, 32
        %v977 = vpop.permute.xlu0 %976
        %978 = vrot.lane.b32.xlu0 %v417, 32
        %v979 = vpop.permute.xlu0 %978
        %980 = vrot.lane.b32.xlu0 %v421, 32
        %v981 = vpop.permute.xlu0 %980
        %982 = vrot.lane.b32.xlu0 %v420, 32
        %v983 = vpop.permute.xlu0 %982
        %984 = vrot.lane.b32.xlu0 %v424, 32
        %v985 = vpop.permute.xlu0 %984
        %986 = vrot.lane.b32.xlu0 %v423, 32
        %v987 = vpop.permute.xlu0 %986
        %988 = vrot.lane.b32.xlu0 %v427, 32
        %v989 = vpop.permute.xlu0 %988
        %990 = vrot.lane.b32.xlu0 %v426, 32
        %v991 = vpop.permute.xlu0 %990
        %992 = vrot.lane.b32.xlu0 %v430, 32
        %v993 = vpop.permute.xlu0 %992
        %994 = vrot.lane.b32.xlu0 %v429, 32
        %v995 = vpop.permute.xlu0 %994
        %996 = vrot.lane.b32.xlu0 %v433, 32
        %v997 = vpop.permute.xlu0 %996
        %998 = vrot.lane.b32.xlu0 %v432, 32
        %v999 = vpop.permute.xlu0 %998
        %1000 = vrot.lane.b32.xlu0 %v436, 32
        %v1001 = vpop.permute.xlu0 %1000
        %1002 = vrot.lane.b32.xlu0 %v435, 32
        %v1003 = vpop.permute.xlu0 %1002
        %1004 = vrot.lane.b32.xlu0 %v439, 32
        %v1005 = vpop.permute.xlu0 %1004
        %1006 = vrot.lane.b32.xlu0 %v438, 32
        %v1007 = vpop.permute.xlu0 %1006
        %1008 = vrot.lane.b32.xlu0 %v699, 32
        %v1009 = vpop.permute.xlu0 %1008
        %1010 = vrot.lane.b32.xlu0 %v698, 32
        %v1011 = vpop.permute.xlu0 %1010
        %1012 = vrot.lane.b32.xlu0 %v959, 32
        %v1013 = vpop.permute.xlu0 %1012
        %1014 = vrot.lane.b32.xlu0 %v958, 32
        %v1015 = vpop.permute.xlu0 %1014
        %vm1044 = vcmask 31744
        %v1045 = vsel %vm1044, %v210, %v314
        %v1046 = vsel %vm1044, %v211, %v316
        %v1047 = vsel %vm1044, %v212, %v318
        %v1048 = vsel %vm1044, %v213, %v320
        %v1049 = vsel %vm1044, %v214, %v322
        %v1050 = vsel %vm1044, %v215, %v324
        %v1051 = vsel %vm1044, %v216, %v326
        %v1052 = vsel %vm1044, %v217, %v328
        %v1053 = vsel %vm1044, %v218, %v330
        %v1054 = vsel %vm1044, %v219, %v332
        %v1055 = vsel %vm1044, %v220, %v334
        %v1056 = vsel %vm1044, %v221, %v336
        %v1057 = vsel %vm1044, %v222, %v338
        %v1058 = vsel %vm1044, %v223, %v340
        %v1059 = vsel %vm1044, %v224, %v342
        %v1060 = vsel %vm1044, %v225, %v344
        %v1061 = vsel %vm1044, %v226, %v346
        %v1062 = vsel %vm1044, %v227, %v348
        %v1063 = vsel %vm1044, %v228, %v350
        %v1064 = vsel %vm1044, %v229, %v352
        %v1065 = vsel %vm1044, %v230, %v354
        %v1066 = vsel %vm1044, %v231, %v356
        %v1067 = vsel %vm1044, %v232, %v358
        %v1068 = vsel %vm1044, %v233, %v360
        %v1069 = vsel %vm1044, %v234, %v362
        %v1070 = vsel %vm1044, %v235, %v364
        %v1071 = vsel %vm1044, %v236, %v366
        %v1072 = vsel %vm1044, %v237, %v368
        %vm1073 = vcmask 64512
        %v1074 = vsel %vm1073, %v1045, %v441
        %v1075 = vsel %vm1073, %v1046, %v443
        %v1076 = vsel %vm1073, %v1047, %v445
        %v1077 = vsel %vm1073, %v1048, %v447
        %v1078 = vsel %vm1073, %v1049, %v449
        %v1079 = vsel %vm1073, %v1050, %v451
        %v1080 = vsel %vm1073, %v1051, %v453
        %v1081 = vsel %vm1073, %v1052, %v455
        %v1082 = vsel %vm1073, %v1053, %v457
        %v1083 = vsel %vm1073, %v1054, %v459
        %v1084 = vsel %vm1073, %v1055, %v461
        %v1085 = vsel %vm1073, %v1056, %v463
        %v1086 = vsel %vm1073, %v1057, %v465
        %v1087 = vsel %vm1073, %v1058, %v467
        %v1088 = vsel %vm1073, %v1059, %v469
        %v1089 = vsel %vm1073, %v1060, %v471
        %v1090 = vsel %vm1073, %v1061, %v473
        %v1091 = vsel %vm1073, %v1062, %v475
        %v1092 = vsel %vm1073, %v1063, %v477
        %v1093 = vsel %vm1073, %v1064, %v479
        %v1094 = vsel %vm1073, %v1065, %v481
        %v1095 = vsel %vm1073, %v1066, %v483
        %v1096 = vsel %vm1073, %v1067, %v485
        %v1097 = vsel %vm1073, %v1068, %v487
        %v1098 = vsel %vm1073, %v1069, %v489
        %v1099 = vsel %vm1073, %v1070, %v491
        %v1100 = vsel %vm1073, %v1071, %v493
        %v1101 = vsel %vm1073, %v1072, %v495
        %vm1102 = vcmask 97280
        %v1103 = vsel %vm1102, %v1074, %v527
        %v1104 = vsel %vm1102, %v1075, %v529
        %v1105 = vsel %vm1102, %v1076, %v531
        %v1106 = vsel %vm1102, %v1077, %v533
        %v1107 = vsel %vm1102, %v1078, %v535
        %v1108 = vsel %vm1102, %v1079, %v537
        %v1109 = vsel %vm1102, %v1080, %v539
        %v1110 = vsel %vm1102, %v1081, %v541
        %v1111 = vsel %vm1102, %v1082, %v543
        %v1112 = vsel %vm1102, %v1083, %v545
        %v1113 = vsel %vm1102, %v1084, %v547
        %v1114 = vsel %vm1102, %v1085, %v549
        %v1115 = vsel %vm1102, %v1086, %v551
        %v1116 = vsel %vm1102, %v1087, %v553
        %v1117 = vsel %vm1102, %v1088, %v555
        %v1118 = vsel %vm1102, %v1089, %v557
        %v1119 = vsel %vm1102, %v1090, %v559
        %v1120 = vsel %vm1102, %v1091, %v561
        %v1121 = vsel %vm1102, %v1092, %v563
        %v1122 = vsel %vm1102, %v1093, %v565
        %v1123 = vsel %vm1102, %v1094, %v567
        %v1124 = vsel %vm1102, %v1095, %v569
        %v1125 = vsel %vm1102, %v1096, %v571
        %v1126 = vsel %vm1102, %v1097, %v573
        %v1127 = vsel %vm1102, %v1098, %v575
        %v1128 = vsel %vm1102, %v1099, %v577
        %v1129 = vsel %vm1102, %v1100, %v579
        %v1130 = vsel %vm1102, %v1101, %v581
        %vm1131 = vcmask 130048
        %v1132 = vsel %vm1131, %v1103, %v614
        %v1133 = vsel %vm1131, %v1104, %v616
        %v1134 = vsel %vm1131, %v1105, %v618
        %v1135 = vsel %vm1131, %v1106, %v620
        %v1136 = vsel %vm1131, %v1107, %v622
        %v1137 = vsel %vm1131, %v1108, %v624
        %v1138 = vsel %vm1131, %v1109, %v626
        %v1139 = vsel %vm1131, %v1110, %v628
        %v1140 = vsel %vm1131, %v1111, %v630
        %v1141 = vsel %vm1131, %v1112, %v632
        %v1142 = vsel %vm1131, %v1113, %v634
        %v1143 = vsel %vm1131, %v1114, %v636
        %v1144 = vsel %vm1131, %v1115, %v638
        %v1145 = vsel %vm1131, %v1116, %v640
        %v1146 = vsel %vm1131, %v1117, %v642
        %v1147 = vsel %vm1131, %v1118, %v644
        %v1148 = vsel %vm1131, %v1119, %v646
        %v1149 = vsel %vm1131, %v1120, %v648
        %v1150 = vsel %vm1131, %v1121, %v650
        %v1151 = vsel %vm1131, %v1122, %v652
        %v1152 = vsel %vm1131, %v1123, %v654
        %v1153 = vsel %vm1131, %v1124, %v656
        %v1154 = vsel %vm1131, %v1125, %v658
        %v1155 = vsel %vm1131, %v1126, %v660
        %v1156 = vsel %vm1131, %v1127, %v662
        %v1157 = vsel %vm1131, %v1128, %v664
        %v1158 = vsel %vm1131, %v1129, %v666
        %v1159 = vsel %vm1131, %v1130, %v668
        %vm1160 = vcmask 162816
        %v1161 = vsel %vm1160, %v1132, %v701
        %v1162 = vsel %vm1160, %v1133, %v703
        %v1163 = vsel %vm1160, %v1134, %v705
        %v1164 = vsel %vm1160, %v1135, %v707
        %v1165 = vsel %vm1160, %v1136, %v709
        %v1166 = vsel %vm1160, %v1137, %v711
        %v1167 = vsel %vm1160, %v1138, %v713
        %v1168 = vsel %vm1160, %v1139, %v715
        %v1169 = vsel %vm1160, %v1140, %v717
        %v1170 = vsel %vm1160, %v1141, %v719
        %v1171 = vsel %vm1160, %v1142, %v721
        %v1172 = vsel %vm1160, %v1143, %v723
        %v1173 = vsel %vm1160, %v1144, %v725
        %v1174 = vsel %vm1160, %v1145, %v727
        %v1175 = vsel %vm1160, %v1146, %v729
        %v1176 = vsel %vm1160, %v1147, %v731
        %v1177 = vsel %vm1160, %v1148, %v733
        %v1178 = vsel %vm1160, %v1149, %v735
        %v1179 = vsel %vm1160, %v1150, %v737
        %v1180 = vsel %vm1160, %v1151, %v739
        %v1181 = vsel %vm1160, %v1152, %v741
        %v1182 = vsel %vm1160, %v1153, %v743
        %v1183 = vsel %vm1160, %v1154, %v745
        %v1184 = vsel %vm1160, %v1155, %v747
        %v1185 = vsel %vm1160, %v1156, %v749
        %v1186 = vsel %vm1160, %v1157, %v751
        %v1187 = vsel %vm1160, %v1158, %v753
        %v1188 = vsel %vm1160, %v1159, %v755
        %vm1189 = vcmask 195584
        %v1190 = vsel %vm1189, %v1161, %v787
        %v1191 = vsel %vm1189, %v1162, %v789
        %v1192 = vsel %vm1189, %v1163, %v791
        %v1193 = vsel %vm1189, %v1164, %v793
        %v1194 = vsel %vm1189, %v1165, %v795
        %v1195 = vsel %vm1189, %v1166, %v797
        %v1196 = vsel %vm1189, %v1167, %v799
        %v1197 = vsel %vm1189, %v1168, %v801
        %v1198 = vsel %vm1189, %v1169, %v803
        %v1199 = vsel %vm1189, %v1170, %v805
        %v1200 = vsel %vm1189, %v1171, %v807
        %v1201 = vsel %vm1189, %v1172, %v809
        %v1202 = vsel %vm1189, %v1173, %v811
        %v1203 = vsel %vm1189, %v1174, %v813
        %v1204 = vsel %vm1189, %v1175, %v815
        %v1205 = vsel %vm1189, %v1176, %v817
        %v1206 = vsel %vm1189, %v1177, %v819
        %v1207 = vsel %vm1189, %v1178, %v821
        %v1208 = vsel %vm1189, %v1179, %v823
        %v1209 = vsel %vm1189, %v1180, %v825
        %v1210 = vsel %vm1189, %v1181, %v827
        %v1211 = vsel %vm1189, %v1182, %v829
        %v1212 = vsel %vm1189, %v1183, %v831
        %v1213 = vsel %vm1189, %v1184, %v833
        %v1214 = vsel %vm1189, %v1185, %v835
        %v1215 = vsel %vm1189, %v1186, %v837
        %v1216 = vsel %vm1189, %v1187, %v839
        %v1217 = vsel %vm1189, %v1188, %v841
        %vm1218 = vcmask 228352
        %v1219 = vsel %vm1218, %v1190, %v874
        %v1220 = vsel %vm1218, %v1191, %v876
        %v1221 = vsel %vm1218, %v1192, %v878
        %v1222 = vsel %vm1218, %v1193, %v880
        %v1223 = vsel %vm1218, %v1194, %v882
        %v1224 = vsel %vm1218, %v1195, %v884
        %v1225 = vsel %vm1218, %v1196, %v886
        %v1226 = vsel %vm1218, %v1197, %v888
        %v1227 = vsel %vm1218, %v1198, %v890
        %v1228 = vsel %vm1218, %v1199, %v892
        %v1229 = vsel %vm1218, %v1200, %v894
        %v1230 = vsel %vm1218, %v1201, %v896
        %v1231 = vsel %vm1218, %v1202, %v898
        %v1232 = vsel %vm1218, %v1203, %v900
        %v1233 = vsel %vm1218, %v1204, %v902
        %v1234 = vsel %vm1218, %v1205, %v904
        %v1235 = vsel %vm1218, %v1206, %v906
        %v1236 = vsel %vm1218, %v1207, %v908
        %v1237 = vsel %vm1218, %v1208, %v910
        %v1238 = vsel %vm1218, %v1209, %v912
        %v1239 = vsel %vm1218, %v1210, %v914
        %v1240 = vsel %vm1218, %v1211, %v916
        %v1241 = vsel %vm1218, %v1212, %v918
        %v1242 = vsel %vm1218, %v1213, %v920
        %v1243 = vsel %vm1218, %v1214, %v922
        %v1244 = vsel %vm1218, %v1215, %v924
        %v1245 = vsel %vm1218, %v1216, %v926
        %v1246 = vsel %vm1218, %v1217, %v928
        %vm1247 = vcmask 261120
        %v1248 = vsel %vm1247, %v1219, %v961
        %v1249 = vsel %vm1247, %v1220, %v963
        %v1250 = vsel %vm1247, %v1221, %v965
        %v1251 = vsel %vm1247, %v1222, %v967
        %v1252 = vsel %vm1247, %v1223, %v969
        %v1253 = vsel %vm1247, %v1224, %v971
        %v1254 = vsel %vm1247, %v1225, %v973
        %v1255 = vsel %vm1247, %v1226, %v975
        %v1256 = vsel %vm1247, %v1227, %v977
        %v1257 = vsel %vm1247, %v1228, %v979
        %v1258 = vsel %vm1247, %v1229, %v981
        %v1259 = vsel %vm1247, %v1230, %v983
        %v1260 = vsel %vm1247, %v1231, %v985
        %v1261 = vsel %vm1247, %v1232, %v987
        %v1262 = vsel %vm1247, %v1233, %v989
        %v1263 = vsel %vm1247, %v1234, %v991
        %v1264 = vsel %vm1247, %v1235, %v993
        %v1265 = vsel %vm1247, %v1236, %v995
        %v1266 = vsel %vm1247, %v1237, %v997
        %v1267 = vsel %vm1247, %v1238, %v999
        %v1268 = vsel %vm1247, %v1239, %v1001
        %v1269 = vsel %vm1247, %v1240, %v1003
        %v1270 = vsel %vm1247, %v1241, %v1005
        %v1271 = vsel %vm1247, %v1242, %v1007
        %v1272 = vsel %vm1247, %v1243, %v1009
        %v1273 = vsel %vm1247, %v1244, %v1011
        %v1274 = vsel %vm1247, %v1245, %v1013
        %v1275 = vsel %vm1247, %v1246, %v1015
        %v1304 = vrot.slane %v1248, 2
        %v1305 = vrot.slane %v1248, 4
        %v1306 = vrot.slane %v1248, 6
        %v1307 = vrot.slane %v1249, 2
        %v1308 = vrot.slane %v1249, 4
        %v1309 = vrot.slane %v1250, 2
        %v1310 = vrot.slane %v1250, 4
        %v1311 = vrot.slane %v1250, 6
        %v1312 = vrot.slane %v1251, 2
        %v1313 = vrot.slane %v1251, 4
        %v1314 = vrot.slane %v1252, 2
        %v1315 = vrot.slane %v1252, 4
        %v1316 = vrot.slane %v1252, 6
        %v1317 = vrot.slane %v1253, 2
        %v1318 = vrot.slane %v1253, 4
        %v1319 = vrot.slane %v1254, 2
        %v1320 = vrot.slane %v1254, 4
        %v1321 = vrot.slane %v1254, 6
        %v1322 = vrot.slane %v1255, 2
        %v1323 = vrot.slane %v1255, 4
        %v1324 = vrot.slane %v1256, 2
        %v1325 = vrot.slane %v1256, 4
        %v1326 = vrot.slane %v1256, 6
        %v1327 = vrot.slane %v1257, 2
        %v1328 = vrot.slane %v1257, 4
        %v1329 = vrot.slane %v1258, 2
        %v1330 = vrot.slane %v1258, 4
        %v1331 = vrot.slane %v1258, 6
        %v1332 = vrot.slane %v1259, 2
        %v1333 = vrot.slane %v1259, 4
        %v1334 = vrot.slane %v1260, 2
        %v1335 = vrot.slane %v1260, 4
        %v1336 = vrot.slane %v1260, 6
        %v1337 = vrot.slane %v1261, 2
        %v1338 = vrot.slane %v1261, 4
        %v1339 = vrot.slane %v1262, 2
        %v1340 = vrot.slane %v1262, 4
        %v1341 = vrot.slane %v1262, 6
        %v1342 = vrot.slane %v1263, 2
        %v1343 = vrot.slane %v1263, 4
        %v1344 = vrot.slane %v1264, 2
        %v1345 = vrot.slane %v1264, 4
        %v1346 = vrot.slane %v1264, 6
        %v1347 = vrot.slane %v1265, 2
        %v1348 = vrot.slane %v1265, 4
        %v1349 = vrot.slane %v1266, 2
        %v1350 = vrot.slane %v1266, 4
        %v1351 = vrot.slane %v1266, 6
        %v1352 = vrot.slane %v1267, 2
        %v1353 = vrot.slane %v1267, 4
        %v1354 = vrot.slane %v1268, 2
        %v1355 = vrot.slane %v1268, 4
        %v1356 = vrot.slane %v1268, 6
        %v1357 = vrot.slane %v1269, 2
        %v1358 = vrot.slane %v1269, 4
        %v1359 = vrot.slane %v1270, 2
        %v1360 = vrot.slane %v1270, 4
        %v1361 = vrot.slane %v1270, 6
        %v1362 = vrot.slane %v1271, 2
        %v1363 = vrot.slane %v1271, 4
        %v1364 = vrot.slane %v1272, 2
        %v1365 = vrot.slane %v1272, 4
        %v1366 = vrot.slane %v1272, 6
        %v1367 = vrot.slane %v1273, 2
        %v1368 = vrot.slane %v1273, 4
        %v1369 = vrot.slane %v1274, 2
        %v1370 = vrot.slane %v1274, 4
        %v1371 = vrot.slane %v1274, 6
        %v1372 = vrot.slane %v1275, 2
        %v1373 = vrot.slane %v1275, 4
        %1374 = vst [vmem:[#allocation1] ss:$4 sm:$0xff] %v1248
        %s1375 = scalar_lea.vmem [#allocation1], 1
        %1376 = vst [vmem:[%s1375] ss:$4 sm:$0xff] %v1304
        %s1377 = scalar_lea.vmem [#allocation1], 2
        %1378 = vst [vmem:[%s1377] ss:$4 sm:$0xff] %v1305
        %s1379 = scalar_lea.vmem [#allocation1], 3
        %1380 = vst [vmem:[%s1379] ss:$4 sm:$0xff] %v1306
        %s1381 = scalar_lea.vmem [#allocation1], 32
        %1382 = vst [vmem:[%s1381] ss:$4 sm:$0xff] %v1249
        %s1383 = scalar_lea.vmem [#allocation1], 33
        %1384 = vst [vmem:[%s1383] ss:$4 sm:$0xff] %v1307
        %s1385 = scalar_lea.vmem [#allocation1], 34
        %1386 = vst [vmem:[%s1385] ss:$4 sm:$0xff] %v1308
        %s1387 = scalar_lea.vmem [#allocation1], 35
        %1388 = vst [vmem:[%s1387] ss:$4 sm:$0xff] %v1250
        %v1389 = vld.sshfl [vmem:[#allocation1] sm:$0xff pattern:$0x73625140]
        %v1390 = vld.sshfl [vmem:[#allocation1 + $0x20] sm:$0xff pattern:$0x73625140]
        %1391 = vst [vmem:[#allocation1] ss:$4 sm:$0xff] %v1309
        %1392 = vst [vmem:[%s1375] ss:$4 sm:$0xff] %v1310
        %1393 = vst [vmem:[%s1377] ss:$4 sm:$0xff] %v1311
        %1394 = vst [vmem:[%s1379] ss:$4 sm:$0xff] %v1251
        %1395 = vst [vmem:[%s1381] ss:$4 sm:$0xff] %v1312
        %1396 = vst [vmem:[%s1383] ss:$4 sm:$0xff] %v1313
        %1397 = vst [vmem:[%s1385] ss:$4 sm:$0xff] %v1252
        %1398 = vst [vmem:[%s1387] ss:$4 sm:$0xff] %v1314
        %v1399 = vld.sshfl [vmem:[#allocation1] sm:$0xff pattern:$0x73625140]
        %v1400 = vld.sshfl [vmem:[#allocation1 + $0x20] sm:$0xff pattern:$0x73625140]
        %1401 = vst [vmem:[#allocation1] ss:$4 sm:$0xff] %v1315
        %1402 = vst [vmem:[%s1375] ss:$4 sm:$0xff] %v1316
        %1403 = vst [vmem:[%s1377] ss:$4 sm:$0xff] %v1253
        %1404 = vst [vmem:[%s1379] ss:$4 sm:$0xff] %v1317
        %1405 = vst [vmem:[%s1381] ss:$4 sm:$0xff] %v1318
        %1406 = vst [vmem:[%s1383] ss:$4 sm:$0xff] %v1254
        %1407 = vst [vmem:[%s1385] ss:$4 sm:$0xff] %v1319
        %1408 = vst [vmem:[%s1387] ss:$4 sm:$0xff] %v1320
        %v1409 = vld.sshfl [vmem:[#allocation1] sm:$0xff pattern:$0x73625140]
        %v1410 = vld.sshfl [vmem:[#allocation1 + $0x20] sm:$0xff pattern:$0x73625140]
        %1411 = vst [vmem:[#allocation1] ss:$4 sm:$0xff] %v1321
        %1412 = vst [vmem:[%s1375] ss:$4 sm:$0xff] %v1255
        %1413 = vst [vmem:[%s1377] ss:$4 sm:$0xff] %v1322
        %1414 = vst [vmem:[%s1379] ss:$4 sm:$0xff] %v1323
        %1415 = vst [vmem:[%s1381] ss:$4 sm:$0xff] %v1256
        %1416 = vst [vmem:[%s1383] ss:$4 sm:$0xff] %v1324
        %1417 = vst [vmem:[%s1385] ss:$4 sm:$0xff] %v1325
        %1418 = vst [vmem:[%s1387] ss:$4 sm:$0xff] %v1326
        %v1419 = vld.sshfl [vmem:[#allocation1] sm:$0xff pattern:$0x73625140]
        %v1420 = vld.sshfl [vmem:[#allocation1 + $0x20] sm:$0xff pattern:$0x73625140]
        %1421 = vst [vmem:[#allocation1] ss:$4 sm:$0xff] %v1257
        %1422 = vst [vmem:[%s1375] ss:$4 sm:$0xff] %v1327
        %1423 = vst [vmem:[%s1377] ss:$4 sm:$0xff] %v1328
        %1424 = vst [vmem:[%s1379] ss:$4 sm:$0xff] %v1258
        %1425 = vst [vmem:[%s1381] ss:$4 sm:$0xff] %v1329
        %1426 = vst [vmem:[%s1383] ss:$4 sm:$0xff] %v1330
        %1427 = vst [vmem:[%s1385] ss:$4 sm:$0xff] %v1331
        %1428 = vst [vmem:[%s1387] ss:$4 sm:$0xff] %v1259
        %v1429 = vld.sshfl [vmem:[#allocation1] sm:$0xff pattern:$0x73625140]
        %v1430 = vld.sshfl [vmem:[#allocation1 + $0x20] sm:$0xff pattern:$0x73625140]
        %1431 = vst [vmem:[#allocation1] ss:$4 sm:$0xff] %v1332
        %1432 = vst [vmem:[%s1375] ss:$4 sm:$0xff] %v1333
        %1433 = vst [vmem:[%s1377] ss:$4 sm:$0xff] %v1260
        %1434 = vst [vmem:[%s1379] ss:$4 sm:$0xff] %v1334
        %1435 = vst [vmem:[%s1381] ss:$4 sm:$0xff] %v1335
        %1436 = vst [vmem:[%s1383] ss:$4 sm:$0xff] %v1336
        %1437 = vst [vmem:[%s1385] ss:$4 sm:$0xff] %v1261
        %1438 = vst [vmem:[%s1387] ss:$4 sm:$0xff] %v1337
        %v1439 = vld.sshfl [vmem:[#allocation1] sm:$0xff pattern:$0x73625140]
        %v1440 = vld.sshfl [vmem:[#allocation1 + $0x20] sm:$0xff pattern:$0x73625140]
        %1441 = vst [vmem:[#allocation1] ss:$4 sm:$0xff] %v1338
        %1442 = vst [vmem:[%s1375] ss:$4 sm:$0xff] %v1262
        %1443 = vst [vmem:[%s1377] ss:$4 sm:$0xff] %v1339
        %1444 = vst [vmem:[%s1379] ss:$4 sm:$0xff] %v1340
        %1445 = vst [vmem:[%s1381] ss:$4 sm:$0xff] %v1341
        %1446 = vst [vmem:[%s1383] ss:$4 sm:$0xff] %v1263
        %1447 = vst [vmem:[%s1385] ss:$4 sm:$0xff] %v1342
        %1448 = vst [vmem:[%s1387] ss:$4 sm:$0xff] %v1343
        %v1449 = vld.sshfl [vmem:[#allocation1] sm:$0xff pattern:$0x73625140]
        %v1450 = vld.sshfl [vmem:[#allocation1 + $0x20] sm:$0xff pattern:$0x73625140]
        %1451 = vst [vmem:[#allocation1] ss:$4 sm:$0xff] %v1264
        %1452 = vst [vmem:[%s1375] ss:$4 sm:$0xff] %v1344
        %1453 = vst [vmem:[%s1377] ss:$4 sm:$0xff] %v1345
        %1454 = vst [vmem:[%s1379] ss:$4 sm:$0xff] %v1346
        %1455 = vst [vmem:[%s1381] ss:$4 sm:$0xff] %v1265
        %1456 = vst [vmem:[%s1383] ss:$4 sm:$0xff] %v1347
        %1457 = vst [vmem:[%s1385] ss:$4 sm:$0xff] %v1348
        %1458 = vst [vmem:[%s1387] ss:$4 sm:$0xff] %v1266
        %v1459 = vld.sshfl [vmem:[#allocation1] sm:$0xff pattern:$0x73625140]
        %v1460 = vld.sshfl [vmem:[#allocation1 + $0x20] sm:$0xff pattern:$0x73625140]
        %1461 = vst [vmem:[#allocation1] ss:$4 sm:$0xff] %v1349
        %1462 = vst [vmem:[%s1375] ss:$4 sm:$0xff] %v1350
        %1463 = vst [vmem:[%s1377] ss:$4 sm:$0xff] %v1351
        %1464 = vst [vmem:[%s1379] ss:$4 sm:$0xff] %v1267
        %1465 = vst [vmem:[%s1381] ss:$4 sm:$0xff] %v1352
        %1466 = vst [vmem:[%s1383] ss:$4 sm:$0xff] %v1353
        %1467 = vst [vmem:[%s1385] ss:$4 sm:$0xff] %v1268
        %1468 = vst [vmem:[%s1387] ss:$4 sm:$0xff] %v1354
        %v1469 = vld.sshfl [vmem:[#allocation1] sm:$0xff pattern:$0x73625140]
        %v1470 = vld.sshfl [vmem:[#allocation1 + $0x20] sm:$0xff pattern:$0x73625140]
        %1471 = vst [vmem:[#allocation1] ss:$4 sm:$0xff] %v1355
        %1472 = vst [vmem:[%s1375] ss:$4 sm:$0xff] %v1356
        %1473 = vst [vmem:[%s1377] ss:$4 sm:$0xff] %v1269
        %1474 = vst [vmem:[%s1379] ss:$4 sm:$0xff] %v1357
        %1475 = vst [vmem:[%s1381] ss:$4 sm:$0xff] %v1358
        %1476 = vst [vmem:[%s1383] ss:$4 sm:$0xff] %v1270
        %1477 = vst [vmem:[%s1385] ss:$4 sm:$0xff] %v1359
        %1478 = vst [vmem:[%s1387] ss:$4 sm:$0xff] %v1360
        %v1479 = vld.sshfl [vmem:[#allocation1] sm:$0xff pattern:$0x73625140]
        %v1480 = vld.sshfl [vmem:[#allocation1 + $0x20] sm:$0xff pattern:$0x73625140]
        %1481 = vst [vmem:[#allocation1] ss:$4 sm:$0xff] %v1361
        %1482 = vst [vmem:[%s1375] ss:$4 sm:$0xff] %v1271
        %1483 = vst [vmem:[%s1377] ss:$4 sm:$0xff] %v1362
        %1484 = vst [vmem:[%s1379] ss:$4 sm:$0xff] %v1363
        %1485 = vst [vmem:[%s1381] ss:$4 sm:$0xff] %v1272
        %1486 = vst [vmem:[%s1383] ss:$4 sm:$0xff] %v1364
        %1487 = vst [vmem:[%s1385] ss:$4 sm:$0xff] %v1365
        %1488 = vst [vmem:[%s1387] ss:$4 sm:$0xff] %v1366
        %v1489 = vld.sshfl [vmem:[#allocation1] sm:$0xff pattern:$0x73625140]
        %v1490 = vld.sshfl [vmem:[#allocation1 + $0x20] sm:$0xff pattern:$0x73625140]
        %1491 = vst [vmem:[#allocation1] ss:$4 sm:$0xff] %v1273
        %1492 = vst [vmem:[%s1375] ss:$4 sm:$0xff] %v1367
        %1493 = vst [vmem:[%s1377] ss:$4 sm:$0xff] %v1368
        %1494 = vst [vmem:[%s1379] ss:$4 sm:$0xff] %v1274
        %1495 = vst [vmem:[%s1381] ss:$4 sm:$0xff] %v1369
        %1496 = vst [vmem:[%s1383] ss:$4 sm:$0xff] %v1370
        %1497 = vst [vmem:[%s1385] ss:$4 sm:$0xff] %v1371
        %1498 = vst [vmem:[%s1387] ss:$4 sm:$0xff] %v1275
        %v1499 = vld.sshfl [vmem:[#allocation1] sm:$0xff pattern:$0x73625140]
        %v1500 = vld.sshfl [vmem:[#allocation1 + $0x20] sm:$0xff pattern:$0x73625140]
        %1501 = vst [vmem:[#allocation1] ss:$4 sm:$0xff] %v1372
        %1502 = vst [vmem:[%s1375] ss:$4 sm:$0xff] %v1373
        %v1503 = vld.sshfl [vmem:[#allocation1] sm:$0xff pattern:$0x73625140]
        %v1529 = vpack.c.bf16 %v1390, %v1389
        %v1530 = vpack.c.bf16 %v1400, %v1399
        %v1531 = vpack.c.bf16 %v1410, %v1409
        %v1532 = vpack.c.bf16 %v1420, %v1419
        %v1533 = vpack.c.bf16 %v1430, %v1429
        %v1534 = vpack.c.bf16 %v1440, %v1439
        %v1535 = vpack.c.bf16 %v1450, %v1449
        %v1536 = vpack.c.bf16 %v1460, %v1459
        %v1537 = vpack.c.bf16 %v1470, %v1469
        %v1538 = vpack.c.bf16 %v1480, %v1479
        %v1539 = vpack.c.bf16 %v1490, %v1489
        %v1540 = vpack.c.bf16 %v1500, %v1499
        %v1541 = vpack.c.bf16 %v1503, %v1503
        %v1542 = vld [vmem:[%s1] sm:$0xf]
        %v1543 = vld [vmem:[%s1 + $0x4] sm:$0xf]
        %v1544 = vld [vmem:[%s1 + $0x8] sm:$0xf]
        %v1545 = vld [vmem:[%s1 + $0xc] sm:$0xf]
        %v1546 = vld [vmem:[%s1 + $0x10] sm:$0x3]
        %v1552 = vunpack.c.l.b16 %v1542
        %v1553 = vunpack.c.l.b16 %v1543
        %v1554 = vunpack.c.l.b16 %v1544
        %v1555 = vunpack.c.l.b16 %v1545
        %v1556 = vunpack.c.l.b16 %v1546
        %v1557 = vpack.c.b16 %v1553, %v1552
        %v1558 = vpack.c.b16 %v1555, %v1554
        %v1559 = vpack.c.b16 %v1556, %v1556
        %vm1562 = vcmask 293888
        %v1564 = vsel %vm1562, %v1529, 0
        %v1567 = vsel %vm1562, %v1530, 0
        %v1570 = vsel %vm1562, %v1531, 0
        %v1573 = vsel %vm1562, %v1532, 0
        %v1576 = vsel %vm1562, %v1533, 0
        %v1579 = vsel %vm1562, %v1534, 0
        %v1582 = vsel %vm1562, %v1535, 0
        %v1585 = vsel %vm1562, %v1536, 0
        %v1588 = vsel %vm1562, %v1537, 0
        %v1591 = vsel %vm1562, %v1538, 0
        %v1594 = vsel %vm1562, %v1539, 0
        %v1597 = vsel %vm1562, %v1540, 0
        %v1600 = vsel %vm1562, %v1541, 0
        %vm1602 = vcmask 1041408
        %v1604 = vsel %vm1602, %v1559, 0
        %1606 = vmatpush.bf16.msra.mxu0 0
        %1607 = vmatpush.bf16.msra.mxu0 0
        %1608 = vmatpush.bf16.msra.mxu0 0
        %1609 = vmatpush.bf16.msra.mxu0 0
        %1610 = vmatpush.bf16.msra.mxu0 0
        %1611 = vmatpush.bf16.msra.mxu0 %v1604
        %1612 = vmatpush.bf16.msra.mxu0 %v1558
        %1613 = vmatpush.bf16.msra.mxu0 %v1557
        %1614 = vmatmul.bf16.gmra.mxu0 %v1564
        %v1615 = vpop.f32.mrf.mxu0
        %v1616 = vadd.f32 0.0, %v1615
        %v1617 = vpop.f32.mrf.mxu0
        %v1618 = vadd.f32 0.0, %v1617
        %1619 = vmatmul.bf16.gmra.mxu0 %v1567
        %v1620 = vpop.f32.mrf.mxu0
        %v1621 = vadd.f32 0.0, %v1620
        %v1622 = vpop.f32.mrf.mxu0
        %v1623 = vadd.f32 0.0, %v1622
        %1624 = vmatmul.bf16.gmra.mxu0 %v1570
        %v1625 = vpop.f32.mrf.mxu0
        %v1626 = vadd.f32 0.0, %v1625
        %v1627 = vpop.f32.mrf.mxu0
        %v1628 = vadd.f32 0.0, %v1627
        %1629 = vmatmul.bf16.gmra.mxu0 %v1573
        %v1630 = vpop.f32.mrf.mxu0
        %v1631 = vadd.f32 0.0, %v1630
        %v1632 = vpop.f32.mrf.mxu0
        %v1633 = vadd.f32 0.0, %v1632
        %1634 = vmatmul.bf16.gmra.mxu0 %v1576
        %v1635 = vpop.f32.mrf.mxu0
        %v1636 = vadd.f32 0.0, %v1635
        %v1637 = vpop.f32.mrf.mxu0
        %v1638 = vadd.f32 0.0, %v1637
        %1639 = vmatmul.bf16.gmra.mxu0 %v1579
        %v1640 = vpop.f32.mrf.mxu0
        %v1641 = vadd.f32 0.0, %v1640
        %v1642 = vpop.f32.mrf.mxu0
        %v1643 = vadd.f32 0.0, %v1642
        %1644 = vmatmul.bf16.gmra.mxu0 %v1582
        %v1645 = vpop.f32.mrf.mxu0
        %v1646 = vadd.f32 0.0, %v1645
        %v1647 = vpop.f32.mrf.mxu0
        %v1648 = vadd.f32 0.0, %v1647
        %1649 = vmatmul.bf16.gmra.mxu0 %v1585
        %v1650 = vpop.f32.mrf.mxu0
        %v1651 = vadd.f32 0.0, %v1650
        %v1652 = vpop.f32.mrf.mxu0
        %v1653 = vadd.f32 0.0, %v1652
        %1654 = vmatmul.bf16.gmra.mxu0 %v1588
        %v1655 = vpop.f32.mrf.mxu0
        %v1656 = vadd.f32 0.0, %v1655
        %v1657 = vpop.f32.mrf.mxu0
        %v1658 = vadd.f32 0.0, %v1657
        %1659 = vmatmul.bf16.gmra.mxu0 %v1591
        %v1660 = vpop.f32.mrf.mxu0
        %v1661 = vadd.f32 0.0, %v1660
        %v1662 = vpop.f32.mrf.mxu0
        %v1663 = vadd.f32 0.0, %v1662
        %1664 = vmatmul.bf16.gmra.mxu0 %v1594
        %v1665 = vpop.f32.mrf.mxu0
        %v1666 = vadd.f32 0.0, %v1665
        %v1667 = vpop.f32.mrf.mxu0
        %v1668 = vadd.f32 0.0, %v1667
        %1669 = vmatmul.bf16.gmra.mxu0 %v1597
        %v1670 = vpop.f32.mrf.mxu0
        %v1671 = vadd.f32 0.0, %v1670
        %v1672 = vpop.f32.mrf.mxu0
        %v1673 = vadd.f32 0.0, %v1672
        %1674 = vmatmul.bf16.gmra.mxu0 %v1600
        %v1675 = vpop.f32.mrf.mxu0
        %v1676 = vadd.f32 0.0, %v1675
        %v1677 = vpop.f32.mrf.mxu0
        %1678 = vdwg.mxu0
        %v1704 = vrot.slane %v1616, 2
        %v1705 = vrot.slane %v1616, 4
        %v1706 = vrot.slane %v1616, 6
        %v1707 = vrot.slane %v1618, 2
        %v1708 = vrot.slane %v1618, 4
        %v1709 = vrot.slane %v1618, 6
        %v1710 = vrot.slane %v1621, 2
        %v1711 = vrot.slane %v1621, 4
        %v1712 = vrot.slane %v1621, 6
        %v1713 = vrot.slane %v1623, 2
        %v1714 = vrot.slane %v1623, 4
        %v1715 = vrot.slane %v1623, 6
        %v1716 = vrot.slane %v1626, 2
        %v1717 = vrot.slane %v1626, 4
        %v1718 = vrot.slane %v1626, 6
        %v1719 = vrot.slane %v1628, 2
        %v1720 = vrot.slane %v1628, 4
        %v1721 = vrot.slane %v1628, 6
        %v1722 = vrot.slane %v1631, 2
        %v1723 = vrot.slane %v1631, 4
        %v1724 = vrot.slane %v1631, 6
        %v1725 = vrot.slane %v1633, 2
        %v1726 = vrot.slane %v1633, 4
        %v1727 = vrot.slane %v1633, 6
        %v1728 = vrot.slane %v1636, 2
        %v1729 = vrot.slane %v1636, 4
        %v1730 = vrot.slane %v1636, 6
        %v1731 = vrot.slane %v1638, 2
        %v1732 = vrot.slane %v1638, 4
        %v1733 = vrot.slane %v1638, 6
        %v1734 = vrot.slane %v1641, 2
        %v1735 = vrot.slane %v1641, 4
        %v1736 = vrot.slane %v1641, 6
        %v1737 = vrot.slane %v1643, 2
        %v1738 = vrot.slane %v1643, 4
        %v1739 = vrot.slane %v1643, 6
        %v1740 = vrot.slane %v1646, 2
        %v1741 = vrot.slane %v1646, 4
        %v1742 = vrot.slane %v1646, 6
        %v1743 = vrot.slane %v1648, 2
        %v1744 = vrot.slane %v1648, 4
        %v1745 = vrot.slane %v1648, 6
        %v1746 = vrot.slane %v1651, 2
        %v1747 = vrot.slane %v1651, 4
        %v1748 = vrot.slane %v1651, 6
        %v1749 = vrot.slane %v1653, 2
        %v1750 = vrot.slane %v1653, 4
        %v1751 = vrot.slane %v1653, 6
        %v1752 = vrot.slane %v1656, 2
        %v1753 = vrot.slane %v1656, 4
        %v1754 = vrot.slane %v1656, 6
        %v1755 = vrot.slane %v1658, 2
        %v1756 = vrot.slane %v1658, 4
        %v1757 = vrot.slane %v1658, 6
        %v1758 = vrot.slane %v1661, 2
        %v1759 = vrot.slane %v1661, 4
        %v1760 = vrot.slane %v1661, 6
        %v1761 = vrot.slane %v1663, 2
        %v1762 = vrot.slane %v1663, 4
        %v1763 = vrot.slane %v1663, 6
        %v1764 = vrot.slane %v1666, 2
        %v1765 = vrot.slane %v1666, 4
        %v1766 = vrot.slane %v1666, 6
        %v1767 = vrot.slane %v1668, 2
        %v1768 = vrot.slane %v1668, 4
        %v1769 = vrot.slane %v1668, 6
        %v1770 = vrot.slane %v1671, 2
        %v1771 = vrot.slane %v1671, 4
        %v1772 = vrot.slane %v1671, 6
        %v1773 = vrot.slane %v1673, 2
        %v1774 = vrot.slane %v1673, 4
        %v1775 = vrot.slane %v1673, 6
        %v1776 = vrot.slane %v1676, 2
        %1777 = vst [vmem:[#allocation1] ss:$4 sm:$0xff] %v1616
        %s1778 = scalar_lea.vmem [#allocation1], 1
        %1779 = vst [vmem:[%s1778] ss:$4 sm:$0xff] %v1704
        %s1780 = scalar_lea.vmem [#allocation1], 2
        %1781 = vst [vmem:[%s1780] ss:$4 sm:$0xff] %v1705
        %s1782 = scalar_lea.vmem [#allocation1], 3
        %1783 = vst [vmem:[%s1782] ss:$4 sm:$0xff] %v1706
        %s1784 = scalar_lea.vmem [#allocation1], 32
        %1785 = vst [vmem:[%s1784] ss:$4 sm:$0xff] %v1618
        %s1786 = scalar_lea.vmem [#allocation1], 33
        %1787 = vst [vmem:[%s1786] ss:$4 sm:$0xff] %v1707
        %s1788 = scalar_lea.vmem [#allocation1], 34
        %1789 = vst [vmem:[%s1788] ss:$4 sm:$0xff] %v1708
        %v1790 = vld.sshfl [vmem:[#allocation1] sm:$0xff pattern:$0x73625140]
        %v1791 = vld.sshfl [vmem:[#allocation1 + $0x20] sm:$0xff pattern:$0x73625140]
        %1792 = vst [vmem:[#allocation1] ss:$4 sm:$0xff] %v1709
        %1793 = vst [vmem:[%s1778] ss:$4 sm:$0xff] %v1621
        %1794 = vst [vmem:[%s1780] ss:$4 sm:$0xff] %v1710
        %1795 = vst [vmem:[%s1782] ss:$4 sm:$0xff] %v1711
        %1796 = vst [vmem:[%s1784] ss:$4 sm:$0xff] %v1712
        %1797 = vst [vmem:[%s1786] ss:$4 sm:$0xff] %v1623
        %1798 = vst [vmem:[%s1788] ss:$4 sm:$0xff] %v1713
        %v1799 = vld.sshfl [vmem:[#allocation1] sm:$0xff pattern:$0x73625140]
        %v1800 = vld.sshfl [vmem:[#allocation1 + $0x20] sm:$0xff pattern:$0x73625140]
        %1801 = vst [vmem:[#allocation1] ss:$4 sm:$0xff] %v1714
        %1802 = vst [vmem:[%s1778] ss:$4 sm:$0xff] %v1715
        %1803 = vst [vmem:[%s1780] ss:$4 sm:$0xff] %v1626
        %1804 = vst [vmem:[%s1782] ss:$4 sm:$0xff] %v1716
        %1805 = vst [vmem:[%s1784] ss:$4 sm:$0xff] %v1717
        %1806 = vst [vmem:[%s1786] ss:$4 sm:$0xff] %v1718
        %1807 = vst [vmem:[%s1788] ss:$4 sm:$0xff] %v1628
        %v1808 = vld.sshfl [vmem:[#allocation1] sm:$0xff pattern:$0x73625140]
        %v1809 = vld.sshfl [vmem:[#allocation1 + $0x20] sm:$0xff pattern:$0x73625140]
        %1810 = vst [vmem:[#allocation1] ss:$4 sm:$0xff] %v1719
        %1811 = vst [vmem:[%s1778] ss:$4 sm:$0xff] %v1720
        %1812 = vst [vmem:[%s1780] ss:$4 sm:$0xff] %v1721
        %1813 = vst [vmem:[%s1782] ss:$4 sm:$0xff] %v1631
        %1814 = vst [vmem:[%s1784] ss:$4 sm:$0xff] %v1722
        %1815 = vst [vmem:[%s1786] ss:$4 sm:$0xff] %v1723
        %1816 = vst [vmem:[%s1788] ss:$4 sm:$0xff] %v1724
        %v1817 = vld.sshfl [vmem:[#allocation1] sm:$0xff pattern:$0x73625140]
        %v1818 = vld.sshfl [vmem:[#allocation1 + $0x20] sm:$0xff pattern:$0x73625140]
        %1819 = vst [vmem:[#allocation1] ss:$4 sm:$0xff] %v1633
        %1820 = vst [vmem:[%s1778] ss:$4 sm:$0xff] %v1725
        %1821 = vst [vmem:[%s1780] ss:$4 sm:$0xff] %v1726
        %1822 = vst [vmem:[%s1782] ss:$4 sm:$0xff] %v1727
        %1823 = vst [vmem:[%s1784] ss:$4 sm:$0xff] %v1636
        %1824 = vst [vmem:[%s1786] ss:$4 sm:$0xff] %v1728
        %1825 = vst [vmem:[%s1788] ss:$4 sm:$0xff] %v1729
        %v1826 = vld.sshfl [vmem:[#allocation1] sm:$0xff pattern:$0x73625140]
        %v1827 = vld.sshfl [vmem:[#allocation1 + $0x20] sm:$0xff pattern:$0x73625140]
        %1828 = vst [vmem:[#allocation1] ss:$4 sm:$0xff] %v1730
        %1829 = vst [vmem:[%s1778] ss:$4 sm:$0xff] %v1638
        %1830 = vst [vmem:[%s1780] ss:$4 sm:$0xff] %v1731
        %1831 = vst [vmem:[%s1782] ss:$4 sm:$0xff] %v1732
        %1832 = vst [vmem:[%s1784] ss:$4 sm:$0xff] %v1733
        %1833 = vst [vmem:[%s1786] ss:$4 sm:$0xff] %v1641
        %1834 = vst [vmem:[%s1788] ss:$4 sm:$0xff] %v1734
        %v1835 = vld.sshfl [vmem:[#allocation1] sm:$0xff pattern:$0x73625140]
        %v1836 = vld.sshfl [vmem:[#allocation1 + $0x20] sm:$0xff pattern:$0x73625140]
        %1837 = vst [vmem:[#allocation1] ss:$4 sm:$0xff] %v1735
        %1838 = vst [vmem:[%s1778] ss:$4 sm:$0xff] %v1736
        %1839 = vst [vmem:[%s1780] ss:$4 sm:$0xff] %v1643
        %1840 = vst [vmem:[%s1782] ss:$4 sm:$0xff] %v1737
        %1841 = vst [vmem:[%s1784] ss:$4 sm:$0xff] %v1738
        %1842 = vst [vmem:[%s1786] ss:$4 sm:$0xff] %v1739
        %1843 = vst [vmem:[%s1788] ss:$4 sm:$0xff] %v1646
        %v1844 = vld.sshfl [vmem:[#allocation1] sm:$0xff pattern:$0x73625140]
        %v1845 = vld.sshfl [vmem:[#allocation1 + $0x20] sm:$0xff pattern:$0x73625140]
        %1846 = vst [vmem:[#allocation1] ss:$4 sm:$0xff] %v1740
        %1847 = vst [vmem:[%s1778] ss:$4 sm:$0xff] %v1741
        %1848 = vst [vmem:[%s1780] ss:$4 sm:$0xff] %v1742
        %1849 = vst [vmem:[%s1782] ss:$4 sm:$0xff] %v1648
        %1850 = vst [vmem:[%s1784] ss:$4 sm:$0xff] %v1743
        %1851 = vst [vmem:[%s1786] ss:$4 sm:$0xff] %v1744
        %1852 = vst [vmem:[%s1788] ss:$4 sm:$0xff] %v1745
        %v1853 = vld.sshfl [vmem:[#allocation1] sm:$0xff pattern:$0x73625140]
        %v1854 = vld.sshfl [vmem:[#allocation1 + $0x20] sm:$0xff pattern:$0x73625140]
        %1855 = vst [vmem:[#allocation1] ss:$4 sm:$0xff] %v1651
        %1856 = vst [vmem:[%s1778] ss:$4 sm:$0xff] %v1746
        %1857 = vst [vmem:[%s1780] ss:$4 sm:$0xff] %v1747
        %1858 = vst [vmem:[%s1782] ss:$4 sm:$0xff] %v1748
        %1859 = vst [vmem:[%s1784] ss:$4 sm:$0xff] %v1653
        %1860 = vst [vmem:[%s1786] ss:$4 sm:$0xff] %v1749
        %1861 = vst [vmem:[%s1788] ss:$4 sm:$0xff] %v1750
        %v1862 = vld.sshfl [vmem:[#allocation1] sm:$0xff pattern:$0x73625140]
        %v1863 = vld.sshfl [vmem:[#allocation1 + $0x20] sm:$0xff pattern:$0x73625140]
        %1864 = vst [vmem:[#allocation1] ss:$4 sm:$0xff] %v1751
        %1865 = vst [vmem:[%s1778] ss:$4 sm:$0xff] %v1656
        %1866 = vst [vmem:[%s1780] ss:$4 sm:$0xff] %v1752
        %1867 = vst [vmem:[%s1782] ss:$4 sm:$0xff] %v1753
        %1868 = vst [vmem:[%s1784] ss:$4 sm:$0xff] %v1754
        %1869 = vst [vmem:[%s1786] ss:$4 sm:$0xff] %v1658
        %1870 = vst [vmem:[%s1788] ss:$4 sm:$0xff] %v1755
        %v1871 = vld.sshfl [vmem:[#allocation1] sm:$0xff pattern:$0x73625140]
        %v1872 = vld.sshfl [vmem:[#allocation1 + $0x20] sm:$0xff pattern:$0x73625140]
        %1873 = vst [vmem:[#allocation1] ss:$4 sm:$0xff] %v1756
        %1874 = vst [vmem:[%s1778] ss:$4 sm:$0xff] %v1757
        %1875 = vst [vmem:[%s1780] ss:$4 sm:$0xff] %v1661
        %1876 = vst [vmem:[%s1782] ss:$4 sm:$0xff] %v1758
        %1877 = vst [vmem:[%s1784] ss:$4 sm:$0xff] %v1759
        %1878 = vst [vmem:[%s1786] ss:$4 sm:$0xff] %v1760
        %1879 = vst [vmem:[%s1788] ss:$4 sm:$0xff] %v1663
        %v1880 = vld.sshfl [vmem:[#allocation1] sm:$0xff pattern:$0x73625140]
        %v1881 = vld.sshfl [vmem:[#allocation1 + $0x20] sm:$0xff pattern:$0x73625140]
        %1882 = vst [vmem:[#allocation1] ss:$4 sm:$0xff] %v1761
        %1883 = vst [vmem:[%s1778] ss:$4 sm:$0xff] %v1762
        %1884 = vst [vmem:[%s1780] ss:$4 sm:$0xff] %v1763
        %1885 = vst [vmem:[%s1782] ss:$4 sm:$0xff] %v1666
        %1886 = vst [vmem:[%s1784] ss:$4 sm:$0xff] %v1764
        %1887 = vst [vmem:[%s1786] ss:$4 sm:$0xff] %v1765
        %1888 = vst [vmem:[%s1788] ss:$4 sm:$0xff] %v1766
        %v1889 = vld.sshfl [vmem:[#allocation1] sm:$0xff pattern:$0x73625140]
        %v1890 = vld.sshfl [vmem:[#allocation1 + $0x20] sm:$0xff pattern:$0x73625140]
        %1891 = vst [vmem:[#allocation1] ss:$4 sm:$0xff] %v1668
        %1892 = vst [vmem:[%s1778] ss:$4 sm:$0xff] %v1767
        %1893 = vst [vmem:[%s1780] ss:$4 sm:$0xff] %v1768
        %1894 = vst [vmem:[%s1782] ss:$4 sm:$0xff] %v1769
        %1895 = vst [vmem:[%s1784] ss:$4 sm:$0xff] %v1671
        %1896 = vst [vmem:[%s1786] ss:$4 sm:$0xff] %v1770
        %1897 = vst [vmem:[%s1788] ss:$4 sm:$0xff] %v1771
        %v1898 = vld.sshfl [vmem:[#allocation1] sm:$0xff pattern:$0x73625140]
        %v1899 = vld.sshfl [vmem:[#allocation1 + $0x20] sm:$0xff pattern:$0x73625140]
        %1900 = vst [vmem:[#allocation1] ss:$4 sm:$0xff] %v1772
        %1901 = vst [vmem:[%s1778] ss:$4 sm:$0xff] %v1673
        %1902 = vst [vmem:[%s1780] ss:$4 sm:$0xff] %v1773
        %1903 = vst [vmem:[%s1782] ss:$4 sm:$0xff] %v1774
        %1904 = vst [vmem:[%s1784] ss:$4 sm:$0xff] %v1775
        %1905 = vst [vmem:[%s1786] ss:$4 sm:$0xff] %v1676
        %1906 = vst [vmem:[%s1788] ss:$4 sm:$0xff] %v1776
        %v1907 = vld.sshfl [vmem:[#allocation1] sm:$0xff pattern:$0x73625140]
        %v1908 = vld.sshfl [vmem:[#allocation1 + $0x20] sm:$0xff pattern:$0x73625140]
        %1937 = vst [vmem:[%s208] sm:$0xff] %v1790
        %1938 = vst [vmem:[%s208 + $0x8] sm:$0x3f] %v1791
        %1939 = vst [vmem:[%s208 + $0x10] sm:$0xff] %v1799
        %1940 = vst [vmem:[%s208 + $0x18] sm:$0x3f] %v1800
        %1941 = vst [vmem:[%s208 + $0x20] sm:$0xff] %v1808
        %1942 = vst [vmem:[%s208 + $0x28] sm:$0x3f] %v1809
        %1943 = vst [vmem:[%s208 + $0x30] sm:$0xff] %v1817
        %1944 = vst [vmem:[%s208 + $0x38] sm:$0x3f] %v1818
        %1945 = vst [vmem:[%s208 + $0x40] sm:$0xff] %v1826
        %1946 = vst [vmem:[%s208 + $0x48] sm:$0x3f] %v1827
        %1947 = vst [vmem:[%s208 + $0x50] sm:$0xff] %v1835
        %1948 = vst [vmem:[%s208 + $0x58] sm:$0x3f] %v1836
        %1949 = vst [vmem:[%s208 + $0x60] sm:$0xff] %v1844
        %1950 = vst [vmem:[%s208 + $0x68] sm:$0x3f] %v1845
        %1951 = vst [vmem:[%s208 + $0x70] sm:$0xff] %v1853
        %1952 = vst [vmem:[%s208 + $0x78] sm:$0x3f] %v1854
        %1953 = vst [vmem:[%s208 + $0x80] sm:$0xff] %v1862
        %1954 = vst [vmem:[%s208 + $0x88] sm:$0x3f] %v1863
        %1955 = vst [vmem:[%s208 + $0x90] sm:$0xff] %v1871
        %1956 = vst [vmem:[%s208 + $0x98] sm:$0x3f] %v1872
        %1957 = vst [vmem:[%s208 + $0xa0] sm:$0xff] %v1880
        %1958 = vst [vmem:[%s208 + $0xa8] sm:$0x3f] %v1881
        %1959 = vst [vmem:[%s208 + $0xb0] sm:$0xff] %v1889
        %1960 = vst [vmem:[%s208 + $0xb8] sm:$0x3f] %v1890
        %1961 = vst [vmem:[%s208 + $0xc0] sm:$0xff] %v1898
        %1962 = vst [vmem:[%s208 + $0xc8] sm:$0x3f] %v1899
        %1963 = vst [vmem:[%s208 + $0xd0] sm:$0xff] %v1907
        %1964 = vst [vmem:[%s208 + $0xd8] sm:$0x3f] %v1908
        %v1965 = vadd.f32 %v1616, %v1618
        %v1966 = vadd.f32 %v1965, %v1621
        %v1967 = vadd.f32 %v1966, %v1623
        %v1968 = vadd.f32 %v1967, %v1626
        %v1969 = vadd.f32 %v1968, %v1628
        %v1970 = vadd.f32 %v1969, %v1631
        %v1971 = vadd.f32 %v1970, %v1633
        %v1972 = vadd.f32 %v1971, %v1636
        %v1973 = vadd.f32 %v1972, %v1638
        %v1974 = vadd.f32 %v1973, %v1641
        %v1975 = vadd.f32 %v1974, %v1643
        %v1976 = vadd.f32 %v1975, %v1646
        %v1977 = vadd.f32 %v1976, %v1648
        %v1978 = vadd.f32 %v1977, %v1651
        %v1979 = vadd.f32 %v1978, %v1653
        %v1980 = vadd.f32 %v1979, %v1656
        %v1981 = vadd.f32 %v1980, %v1658
        %v1982 = vadd.f32 %v1981, %v1661
        %v1983 = vadd.f32 %v1982, %v1663
        %v1984 = vadd.f32 %v1983, %v1666
        %v1985 = vadd.f32 %v1984, %v1668
        %v1986 = vadd.f32 %v1985, %v1671
        %v1987 = vadd.f32 %v1986, %v1673
        %vm1988 = vcmask 1043456
        %v1989 = vsel %vm1988, %v1676, 0.0
        %v1990 = vadd.f32 %v1987, %v1989
        %v1991 = vrot.slane %v1990, 4
        %v1992 = vadd.f32 %v1990, %v1991
        %v1993 = vrot.slane %v1992, 2
        %v1994 = vadd.f32 %v1992, %v1993
        %v1995 = vrot.slane %v1994, 1
        %v1996 = vadd.f32 %v1994, %v1995
        %v1997 = vmul.f32 %v1616, %v1616
        %v1998 = vmul.f32 %v1618, %v1618
        %v1999 = vmul.f32 %v1621, %v1621
        %v2000 = vmul.f32 %v1623, %v1623
        %v2001 = vmul.f32 %v1626, %v1626
        %v2002 = vmul.f32 %v1628, %v1628
        %v2003 = vmul.f32 %v1631, %v1631
        %v2004 = vmul.f32 %v1633, %v1633
        %v2005 = vmul.f32 %v1636, %v1636
        %v2006 = vmul.f32 %v1638, %v1638
        %v2007 = vmul.f32 %v1641, %v1641
        %v2008 = vmul.f32 %v1643, %v1643
        %v2009 = vmul.f32 %v1646, %v1646
        %v2010 = vmul.f32 %v1648, %v1648
        %v2011 = vmul.f32 %v1651, %v1651
        %v2012 = vmul.f32 %v1653, %v1653
        %v2013 = vmul.f32 %v1656, %v1656
        %v2014 = vmul.f32 %v1658, %v1658
        %v2015 = vmul.f32 %v1661, %v1661
        %v2016 = vmul.f32 %v1663, %v1663
        %v2017 = vmul.f32 %v1666, %v1666
        %v2018 = vmul.f32 %v1668, %v1668
        %v2019 = vmul.f32 %v1671, %v1671
        %v2020 = vmul.f32 %v1673, %v1673
        %v2021 = vmul.f32 %v1676, %v1676
        %v2022 = vadd.f32 %v1997, %v1998
        %v2023 = vadd.f32 %v2022, %v1999
        %v2024 = vadd.f32 %v2023, %v2000
        %v2025 = vadd.f32 %v2024, %v2001
        %v2026 = vadd.f32 %v2025, %v2002
        %v2027 = vadd.f32 %v2026, %v2003
        %v2028 = vadd.f32 %v2027, %v2004
        %v2029 = vadd.f32 %v2028, %v2005
        %v2030 = vadd.f32 %v2029, %v2006
        %v2031 = vadd.f32 %v2030, %v2007
        %v2032 = vadd.f32 %v2031, %v2008
        %v2033 = vadd.f32 %v2032, %v2009
        %v2034 = vadd.f32 %v2033, %v2010
        %v2035 = vadd.f32 %v2034, %v2011
        %v2036 = vadd.f32 %v2035, %v2012
        %v2037 = vadd.f32 %v2036, %v2013
        %v2038 = vadd.f32 %v2037, %v2014
        %v2039 = vadd.f32 %v2038, %v2015
        %v2040 = vadd.f32 %v2039, %v2016
        %v2041 = vadd.f32 %v2040, %v2017
        %v2042 = vadd.f32 %v2041, %v2018
        %v2043 = vadd.f32 %v2042, %v2019
        %v2044 = vadd.f32 %v2043, %v2020
        %v2045 = vsel %vm1988, %v2021, 0.0
        %v2046 = vadd.f32 %v2044, %v2045
        %v2047 = vrot.slane %v2046, 4
        %v2048 = vadd.f32 %v2046, %v2047
        %v2049 = vrot.slane %v2048, 2
        %v2050 = vadd.f32 %v2048, %v2049
        %v2051 = vrot.slane %v2050, 1
        %v2052 = vadd.f32 %v2050, %v2051
        %vm2053 = vcmask 1040384
        %v2054 = vsel %vm2053, %v1996, %v2052
        %2055 = vst [vmem:[%s198] sm:$0x3] %v2054
        %p2056 = scmp.lt.s32.totalorder %s19, 1
        %s2057 = scalar_select %p2056, %s19, 1
        %s2058 = smul.addr %s2057, 28
        %s2059 = smul.addr %s2058, 8
        %s2060 = scalar_lea.vmem %s3, %s2059
        %s2061 = sand.u32 %s121, 1
        %s2062 = scalar_lea.sflag [#allocation3], %s2061
        %s2063 = sand.u32 %s121, 1
        %s2064 = smul.addr %s2063, 2
        %s2065 = scalar_lea.vmem [#allocation2], %s2064
        // Predicated region
        $region33: #{tpu_custom_call.1} parent=31 // pred_check
          %p2066 = pneg %p105
        $region34: #{tpu_custom_call.1} parent=31 // pred_check_branch
          %2068 = sbr.rel (%p2066) target = $region36
        $region35: #{tpu_custom_call.1} parent=31 // pred_region
          _
        $region36: #{tpu_custom_call.1} parent=31 // pred_fallthru
          _
        // Predicated region
        $region37: #{tpu_custom_call.1} parent=31 // pred_check
          %p2069 = pneg %p131
        $region38: #{tpu_custom_call.1} parent=31 // pred_check_branch
          %2071 = sbr.rel (%p2069) target = $region40
        $region39: #{tpu_custom_call.1} parent=31 // pred_region
          %2073 = vsyncadd %s2062, 0
          %s2074 = smul.addr %s19, 2
          %s2075 = scalar_lea.hbm %s4, %s2074
          %s2077 = sshll.u32 %s2065, 4
          %s2078 = int_to_ptr.vmem [resolvable:$true] %s2077
          %s2079 = sshll.u32 %s2075, 4
          %s2080 = int_to_ptr.hbm [resolvable:$true] %s2079
          %2082 = dma.vmem_to_hbm [thread:$0]  %s2078, 32, %s2080, %s2062
        $region40: #{tpu_custom_call.1} parent=31 // pred_fallthru
          _
      $region32: #{tpu_custom_call.1} parent=5 // pred_fallthru
        _
      %p2083 = scmp.le.s32.totalorder 2, %s14
      // Predicated region
      $region41: #{tpu_custom_call.1} parent=5 // pred_check
        %p2084 = pneg %p2083
      $region42: #{tpu_custom_call.1} parent=5 // pred_check_branch
        %2086 = sbr.rel (%p2084) target = $region44
      $region43: #{tpu_custom_call.1} parent=5 // pred_region
        %s2087 = ssub.s32 %s14, 2
        // Predicated region
        $region45: #{tpu_custom_call.1} parent=43 // pred_check
          %p2088 = pneg %p111
        $region46: #{tpu_custom_call.1} parent=43 // pred_check_branch
          %2090 = sbr.rel (%p2088) target = $region48
        $region47: #{tpu_custom_call.1} parent=43 // pred_region
          %p2091 = scmp.lt.s32.totalorder %s20, 1
          %s2092 = scalar_select %p2091, %s20, 1
          %s2093 = smul.addr %s2092, 28
          %s2094 = smul.addr %s2093, 8
          %s2095 = scalar_lea.vmem %s3, %s2094
        $region48: #{tpu_custom_call.1} parent=43 // pred_fallthru
          _
        // Predicated region
        $region49: #{tpu_custom_call.1} parent=43 // pred_check
          %p2096 = pneg %p137
        $region50: #{tpu_custom_call.1} parent=43 // pred_check_branch
          %2098 = sbr.rel (%p2096) target = $region52
        $region51: #{tpu_custom_call.1} parent=43 // pred_region
          %s2099 = sand.u32 %s122, 1
          %s2100 = scalar_lea.sflag [#allocation3], %s2099
          %s2101 = sand.u32 %s122, 1
          %s2102 = smul.addr %s2101, 2
          %s2103 = scalar_lea.vmem [#allocation2], %s2102
          %2105 = dma.done %s2100, 32
        $region52: #{tpu_custom_call.1} parent=43 // pred_fallthru
          _
      $region44: #{tpu_custom_call.1} parent=5 // pred_fallthru
        _
    $region6: #{tpu_custom_call.1} parent=1 // loop_footer
      %s18 = sadd.s32 1, %s14
    $region7: #{tpu_custom_call.1} parent=1 // loop_footer_branch
      %13 = sbr.rel target = $region3
    $region8: #{tpu_custom_call.1} parent=1 // loop_exit
      _
    %2106 = vsyncpa [#allocation3], 1
    %s2107 = scalar_lea.sflag [#allocation3], 1
    %2108 = vsyncpa %s2107, 1

</llo_original>
